<compile_context>
chip_gen: v6e
topology: v6e:2x2x1
jax: 0.10.0
libtpu: 0.0.40
codegen_flags: <defaults>
</compile_context>

<pallas_src>
import functools

import jax
import jax.numpy as jnp
from jax import lax
from jax.experimental import pallas as pl
from jax.experimental.pallas import tpu as pltpu


def _round_up(x, m):
    return ((x + m - 1) // m) * m


def _padded_tile_bytes(rows, cols, itemsize):
    # VMEM footprint of a 2-D tile with (8, 128) layout padding.
    return _round_up(max(rows, 1), 8) * _round_up(max(cols, 1), 128) * itemsize


# --------------------------------------------------------------------------- #
# Pass 1: fused im2col + conv-as-matmul (bf16 MXU, f32 accum) + BN partials.
# --------------------------------------------------------------------------- #
def _conv_stats_kernel(xb_ref, w_ref, mask_ref, y_ref, part_ref, *, k, wp, lw):
    ocp = y_ref.shape[-1]
    acc = jnp.zeros((lw, ocp), dtype=jnp.float32)
    # Static unrolled loop over the k*k taps.  For the stride-1 grid the input
    # needed for tap (ki, kj) is a contiguous window of the row-flattened,
    # halo-padded block -> plain static slice, no patch materialization.
    for idx in range(k * k):
        ki, kj = idx // k, idx % k
        off = ki * wp + kj
        xs = xb_ref[0, 0, off:off + lw, :]                       # (lw, IC) bf16
        acc = acc + jnp.dot(xs, w_ref[idx, :, :],                # (IC, OCp) bf16
                            preferred_element_type=jnp.float32)
    y_ref[0, 0, :, :] = acc

    # Exact per-tile BN partial sums over *valid* output positions only.
    m = mask_ref[0, :, :]                                        # (lw, 1) f32
    ym = acc * m
    part_ref[0, 0, 0:1, :] = jnp.sum(ym, axis=0, keepdims=True)
    part_ref[0, 0, 1:2, :] = jnp.sum(ym * acc, axis=0, keepdims=True)


# --------------------------------------------------------------------------- #
# Pass 2: single FMA + ReLU6 clamp.
# --------------------------------------------------------------------------- #
def _bn_relu6_kernel(y_ref, scale_ref, shift_ref, o_ref):
    y = y_ref[0, 0, :, :]
    o_ref[0, 0, :, :] = jnp.clip(y * scale_ref[:, :] + shift_ref[:, :], 0.0, 6.0)


def _pick_toh(oh1, wp, ic, ocp, k, toh=None):
    """Pick an output-row tile: ~512-row M tiles, shrunk to fit VMEM budget."""
    if toh is None:
        toh = max(1, min(oh1, -(-512 // wp)))
    toh = max(1, min(int(toh), oh1))

    def step_bytes(t):
        lw = t * wp
        lblk = (t + k) * wp
        return (2 * (_padded_tile_bytes(lblk, ic, 2)        # xb tile (bf16), 2 bufs
                     + _padded_tile_bytes(lw, ocp, 4)       # y tile (f32)
                     + _padded_tile_bytes(lw, 1, 4)         # mask tile
                     + _padded_tile_bytes(2, ocp, 4))       # partials tile
                + k * k * _padded_tile_bytes(ic, ocp, 2))   # resident weights

    while toh > 1 and step_bytes(toh) > (12 << 20):
        toh = max(1, toh // 2)
    return toh, step_bytes(toh)


@functools.partial(jax.jit, static_argnames=("k", "s", "p", "toh"))
def conv_block_forward(x_nchw, weight_oikk, gamma, beta, *, k, s=1, p=0, toh=None):
    """ConvBlock forward: conv(bias=False) + BatchNorm2d(train stats) + ReLU6."""
    N, IC, H, W = x_nchw.shape
    OC = weight_oikk.shape[0]
    eps = 1e-5

    Hp, Wp = H + 2 * p, W + 2 * p
    assert Hp >= k and Wp >= k, "kernel larger than padded input"
    OH1 = Hp - k + 1                    # stride-1 output rows computed by the kernel
    OHs = (Hp - k) // s + 1             # stride-s output (module semantics)
    OWs = (Wp - k) // s + 1

    OCp = _round_up(OC, 128)            # lane-dense output channels
    KK = k * k

    TOH, step_bytes = _pick_toh(OH1, Wp, IC, OCp, k, toh)
    T = -(-OH1 // TOH)
    LW = TOH * Wp                       # M rows per tile (extended width)
    R_blk = TOH + k                     # input rows per tile (with halo)
    L_blk = R_blk * Wp

    # ---------------- wrapper-side layout plumbing (cheap, ~1x input) ----------------
    x_nhwc = jnp.transpose(x_nchw, (0, 2, 3, 1)).astype(jnp.bfloat16)
    xp = jnp.pad(x_nhwc, ((0, 0), (p, p), (p, p), (0, 0)))
    need_rows = (T - 1) * TOH + R_blk
    if need_rows > Hp:
        xp = jnp.pad(xp, ((0, 0), (0, need_rows - Hp), (0, 0), (0, 0)))
    xb = jnp.stack([xp[:, t * TOH:t * TOH + R_blk] for t in range(T)], axis=1)
    xb = xb.reshape(N, T, L_blk, IC)                        # (N, T, rows*Wp, IC)

    # (OC, IC, k, k) -> (k*k, IC, OCp), bf16, zero-padded output channels.
    w_r = jnp.transpose(weight_oikk, (2, 3, 1, 0)).reshape(KK, IC, OC)
    w_r = jnp.pad(w_r, ((0, 0), (0, 0), (0, OCp - OC))).astype(jnp.bfloat16)

    # Validity mask over the extended stride-1 grid: keeps only positions that
    # belong to the stride-s output (and drops row/column padding).
    oh1 = jnp.arange(T * TOH).reshape(T, TOH)
    row_ok = (oh1 % s == 0) & ((oh1 // s) < OHs)
    ow1 = jnp.arange(Wp)
    col_ok = (ow1 % s == 0) & ((ow1 // s) < OWs)
    mask = (row_ok[:, :, None] & col_ok[None, None, :]).astype(jnp.float32)
    mask = mask.reshape(T, LW, 1)

    vmem_limit = int(min(48 << 20, max(16 << 20, 3 * step_bytes)))

    # ---------------- pass 1: conv + BN partial sums ----------------
    flops1 = int(2 * N * T * LW * KK * IC * OCp)
    bytes1 = int(xb.size * 2 + w_r.size * 2 + mask.size * 4
                 + N * T * LW * OCp * 4 + N * T * 2 * OCp * 4)
    y_ext, partials = pl.pallas_call(
        functools.partial(_conv_stats_kernel, k=k, wp=Wp, lw=LW),
        grid=(N, T),
        in_specs=[
            pl.BlockSpec((1, 1, L_blk, IC), lambda n, t: (n, t, 0, 0)),
            pl.BlockSpec((KK, IC, OCp), lambda n, t: (0, 0, 0)),
            pl.BlockSpec((1, LW, 1), lambda n, t: (t, 0, 0)),
        ],
        out_specs=[
            pl.BlockSpec((1, 1, LW, OCp), lambda n, t: (n, t, 0, 0)),
            pl.BlockSpec((1, 1, 2, OCp), lambda n, t: (n, t, 0, 0)),
        ],
        out_shape=[
            jax.ShapeDtypeStruct((N, T, LW, OCp), jnp.float32),
            jax.ShapeDtypeStruct((N, T, 2, OCp), jnp.float32),
        ],
        compiler_params=pltpu.CompilerParams(
            dimension_semantics=("parallel", "parallel"),
            vmem_limit_bytes=vmem_limit),
        cost_estimate=pl.CostEstimate(flops=flops1, transcendentals=0,
                                      bytes_accessed=bytes1),
    )(xb, w_r, mask)

    # ---------------- global BN statistics (exact over all tiles) ----------------
    sums = jnp.sum(partials, axis=(0, 1))                   # (2, OCp) f32
    count = float(N * OHs * OWs)
    mean = sums[0] / count
    var = jnp.maximum(sums[1] / count - mean * mean, 0.0)   # guard cancellation
    gamma_p = jnp.pad(gamma.astype(jnp.float32), (0, OCp - OC))
    beta_p = jnp.pad(beta.astype(jnp.float32), (0, OCp - OC))
    scale = (gamma_p * lax.rsqrt(var + eps)).reshape(1, OCp)
    shift = (beta_p - mean * scale[0]).reshape(1, OCp)
    # TODO(synk): running_mean/running_var updates for eval-mode BN are not produced.

    # ---------------- pass 2: y*scale + shift, ReLU6 ----------------
    flops2 = int(2 * N * T * LW * OCp)
    bytes2 = int(2 * N * T * LW * OCp * 4)
    out_ext = pl.pallas_call(
        _bn_relu6_kernel,
        grid=(N, T),
        in_specs=[
            pl.BlockSpec((1, 1, LW, OCp), lambda n, t: (n, t, 0, 0)),
            pl.BlockSpec((1, OCp), lambda n, t: (0, 0)),
            pl.BlockSpec((1, OCp), lambda n, t: (0, 0)),
        ],
        out_specs=pl.BlockSpec((1, 1, LW, OCp), lambda n, t: (n, t, 0, 0)),
        out_shape=jax.ShapeDtypeStruct((N, T, LW, OCp), jnp.float32),
        compiler_params=pltpu.CompilerParams(
            dimension_semantics=("parallel", "parallel"),
            vmem_limit_bytes=vmem_limit),
        cost_estimate=pl.CostEstimate(flops=flops2, transcendentals=0,
                                      bytes_accessed=bytes2),
    )(y_ext, scale, shift)

    # ---------------- strip padding / extended columns, back to NCHW ----------------
    out = out_ext.reshape(N, T * TOH, Wp, OCp)
    out = out[:, :(OHs - 1) * s + 1:s, :(OWs - 1) * s + 1:s, :OC]
    return jnp.transpose(out, (0, 3, 1, 2))


def _reference(x_nchw, weight, gamma, beta, k, s, p):
    """Pure-JAX reference (bf16-input conv + training-mode BN + relu6)."""
    y = lax.conv_general_dilated(
        x_nchw.astype(jnp.bfloat16), weight.astype(jnp.bfloat16),
        window_strides=(s, s), padding=[(p, p), (p, p)],
        dimension_numbers=("NCHW", "OIHW", "NCHW"),
        preferred_element_type=jnp.float32)
    mean = jnp.mean(y, axis=(0, 2, 3), keepdims=True)
    var = jnp.mean((y - mean) ** 2, axis=(0, 2, 3), keepdims=True)
    y_hat = (y - mean) * lax.rsqrt(var + 1e-5)
    out = y_hat * gamma.reshape(1, -1, 1, 1) + beta.reshape(1, -1, 1, 1)
    return jnp.clip(out, 0.0, 6.0)


if __name__ == "__main__":
    key = jax.random.PRNGKey(0)
    configs = [
        # ConvBlock(4, 8, 3, s=1, p=1): 3x3 conv, non-dividing row tile (tests masking).
        dict(N=2, IC=4, H=16, W=16, OC=8, k=3, s=1, p=1, toh=6),
        # 1x1 pointwise ConvBlock.
        dict(N=2, IC=8, H=16, W=16, OC=16, k=1, s=1, p=0, toh=None),
        # EntryFlow conv1-style: ConvBlock(3, 32, 3, s=2, p=1) at small spatial size.
        dict(N=2, IC=3, H=16, W=16, OC=32, k=3, s=2, p=1, toh=4),
    ]
    for i, cfg in enumerate(configs):
        key, kx, kw, kg, kb = jax.random.split(key, 5)
        x = jax.random.normal(kx, (cfg["N"], cfg["IC"], cfg["H"], cfg["W"]), jnp.float32)
        w = jax.random.normal(kw, (cfg["OC"], cfg["IC"], cfg["k"], cfg["k"]),
                              jnp.float32) * 0.1
        gamma = 1.0 + 0.1 * jax.random.normal(kg, (cfg["OC"],), jnp.float32)
        beta = 0.1 * jax.random.normal(kb, (cfg["OC"],), jnp.float32)

        out = conv_block_forward(x, w, gamma, beta,
                                 k=cfg["k"], s=cfg["s"], p=cfg["p"], toh=cfg["toh"])
        out = jax.block_until_ready(out)
        ref = _reference(x, w, gamma, beta, cfg["k"], cfg["s"], cfg["p"])

        ohs = (cfg["H"] + 2 * cfg["p"] - cfg["k"]) // cfg["s"] + 1
        ows = (cfg["W"] + 2 * cfg["p"] - cfg["k"]) // cfg["s"] + 1
        assert out.shape == (cfg["N"], cfg["OC"], ohs, ows), (i, out.shape)
        max_err = float(jnp.max(jnp.abs(out - ref)))
        assert jnp.allclose(out, ref, atol=5e-3, rtol=5e-3), (i, max_err)

    print("KERNEL_OK")
</pallas_src>

<mosaic_0001>
module attributes {stable_mosaic.version = 11 : i64} {
  func.func @_bn_relu6_kernel(%arg0: i32, %arg1: i32, %arg2: memref<1x1x108x128xf32, #tpu.memory_space<vmem>>, %arg3: memref<1x128xf32, #tpu.memory_space<vmem>>, %arg4: memref<1x128xf32, #tpu.memory_space<vmem>>, %arg5: memref<1x1x108x128xf32, #tpu.memory_space<vmem>>) attributes {dimension_semantics = [#tpu.dimension_semantics<parallel>, #tpu.dimension_semantics<parallel>], iteration_bounds = array<i64: 2, 3>, scalar_prefetch = 0 : i64, scratch_operands = 0 : i64, tpu.core_type = #tpu.core_type<tc>, window_params = [{transform_indices = @transform_0, window_bounds = array<i64: 1, 1, 108, 128>}, {pipeline_mode = #tpu.pipeline_mode<synchronous>, transform_indices = @transform_1, window_bounds = array<i64: 1, 128>}, {pipeline_mode = #tpu.pipeline_mode<synchronous>, transform_indices = @transform_2, window_bounds = array<i64: 1, 128>}, {transform_indices = @transform_3, window_bounds = array<i64: 1, 1, 108, 128>}]} {
    %c0 = arith.constant 0 : index
    %c0_0 = arith.constant 0 : index
    %c0_1 = arith.constant 0 : index
    %c0_2 = arith.constant 0 : index
    %0 = vector.load %arg2[%c0, %c0_0, %c0_1, %c0_2] : memref<1x1x108x128xf32, #tpu.memory_space<vmem>>, vector<1x1x108x128xf32>
    %1 = vector.shape_cast %0 : vector<1x1x108x128xf32> to vector<108x128xf32>
    %c0_3 = arith.constant 0 : index
    %c0_4 = arith.constant 0 : index
    %2 = vector.load %arg3[%c0_3, %c0_4] : memref<1x128xf32, #tpu.memory_space<vmem>>, vector<1x128xf32>
    %3 = vector.broadcast %2 : vector<1x128xf32> to vector<108x128xf32>
    %4 = arith.mulf %1, %3 : vector<108x128xf32>
    %c0_5 = arith.constant 0 : index
    %c0_6 = arith.constant 0 : index
    %5 = vector.load %arg4[%c0_5, %c0_6] : memref<1x128xf32, #tpu.memory_space<vmem>>, vector<1x128xf32>
    %6 = vector.broadcast %5 : vector<1x128xf32> to vector<108x128xf32>
    %7 = arith.addf %4, %6 : vector<108x128xf32>
    %cst = arith.constant 0.000000e+00 : f32
    %cst_7 = arith.constant 6.000000e+00 : f32
    %8 = vector.broadcast %cst : f32 to vector<108x128xf32>
    %9 = arith.maximumf %8, %7 : vector<108x128xf32>
    %10 = vector.broadcast %cst_7 : f32 to vector<108x128xf32>
    %11 = arith.minimumf %10, %9 : vector<108x128xf32>
    %c0_8 = arith.constant 0 : index
    %c0_9 = arith.constant 0 : index
    %c0_10 = arith.constant 0 : index
    %c0_11 = arith.constant 0 : index
    %12 = vector.load %arg5[%c0_8, %c0_9, %c0_10, %c0_11] : memref<1x1x108x128xf32, #tpu.memory_space<vmem>>, vector<1x1x108x128xf32>
    %13 = vector.shape_cast %12 : vector<1x1x108x128xf32> to vector<108x128xf32>
    %14 = vector.shape_cast %11 : vector<108x128xf32> to vector<1x1x108x128xf32>
    tpu.vector_store %arg5[%c0_8, %c0_9, %c0_10, %c0_11], %14 {strides = array<i32>} : memref<1x1x108x128xf32, #tpu.memory_space<vmem>>, vector<1x1x108x128xf32>,
    return
  }
  func.func @transform_0(%arg0: i32, %arg1: i32) -> (i32, i32, i32, i32) {
    %c0_i32 = arith.constant 0 : i32
    %c0_i32_0 = arith.constant 0 : i32
    %c0_i32_1 = arith.constant 0 : i32
    return %arg0, %arg1, %c0_i32, %c0_i32_0 : i32, i32, i32, i32
  }
  func.func @transform_1(%arg0: i32, %arg1: i32) -> (i32, i32) {
    %c0_i32 = arith.constant 0 : i32
    %c0_i32_0 = arith.constant 0 : i32
    %c0_i32_1 = arith.constant 0 : i32
    return %c0_i32, %c0_i32_0 : i32, i32
  }
  func.func @transform_2(%arg0: i32, %arg1: i32) -> (i32, i32) {
    %c0_i32 = arith.constant 0 : i32
    %c0_i32_0 = arith.constant 0 : i32
    %c0_i32_1 = arith.constant 0 : i32
    return %c0_i32, %c0_i32_0 : i32, i32
  }
  func.func @transform_3(%arg0: i32, %arg1: i32) -> (i32, i32, i32, i32) {
    %c0_i32 = arith.constant 0 : i32
    %c0_i32_0 = arith.constant 0 : i32
    %c0_i32_1 = arith.constant 0 : i32
    return %arg0, %arg1, %c0_i32, %c0_i32_0 : i32, i32, i32, i32
  }
}

module attributes {stable_mosaic.version = 11 : i64} {
  func.func @_conv_stats_kernel(%arg0: i32, %arg1: i32, %arg2: memref<1x1x162x4xbf16, #tpu.memory_space<vmem>>, %arg3: memref<9x4x128xbf16, #tpu.memory_space<vmem>>, %arg4: memref<1x108x1xf32, #tpu.memory_space<vmem>>, %arg5: memref<1x1x108x128xf32, #tpu.memory_space<vmem>>, %arg6: memref<1x1x2x128xf32, #tpu.memory_space<vmem>>) attributes {dimension_semantics = [#tpu.dimension_semantics<parallel>, #tpu.dimension_semantics<parallel>], iteration_bounds = array<i64: 2, 3>, scalar_prefetch = 0 : i64, scratch_operands = 0 : i64, tpu.core_type = #tpu.core_type<tc>, window_params = [{transform_indices = @transform_0, window_bounds = array<i64: 1, 1, 162, 4>}, {pipeline_mode = #tpu.pipeline_mode<synchronous>, transform_indices = @transform_1, window_bounds = array<i64: 9, 4, 128>}, {transform_indices = @transform_2, window_bounds = array<i64: 1, 108, 1>}, {transform_indices = @transform_3, window_bounds = array<i64: 1, 1, 108, 128>}, {transform_indices = @transform_4, window_bounds = array<i64: 1, 1, 2, 128>}]} {
    %cst = arith.constant 0.000000e+00 : f32
    %0 = vector.broadcast %cst : f32 to vector<108x128xf32>
    %c0 = arith.constant 0 : index
    %c0_0 = arith.constant 0 : index
    %c0_1 = arith.constant 0 : index
    %c0_2 = arith.constant 0 : index
    %1 = vector.load %arg2[%c0, %c0_0, %c0_1, %c0_2] : memref<1x1x162x4xbf16, #tpu.memory_space<vmem>>, vector<1x1x108x4xbf16>
    %2 = vector.shape_cast %1 : vector<1x1x108x4xbf16> to vector<108x4xbf16>
    %c0_3 = arith.constant 0 : index
    %c0_4 = arith.constant 0 : index
    %c0_5 = arith.constant 0 : index
    %3 = vector.load %arg3[%c0_3, %c0_4, %c0_5] : memref<9x4x128xbf16, #tpu.memory_space<vmem>>, vector<1x4x128xbf16>
    %4 = vector.shape_cast %3 : vector<1x4x128xbf16> to vector<4x128xbf16>
    %cst_6 = arith.constant dense<0.000000e+00> : vector<108x128xf32>
    %5 = tpu.matmul %2, %4, %cst_6 {dimension_numbers = #tpu.dot_dimension_numbers<[1], [0], [0], [1], [0, 0, 1, 1], [], []>} : vector<108x4xbf16>, vector<4x128xbf16>, vector<108x128xf32> -> vector<108x128xf32>
    %6 = arith.addf %0, %5 : vector<108x128xf32>
    %c0_7 = arith.constant 0 : index
    %c0_8 = arith.constant 0 : index
    %c1 = arith.constant 1 : index
    %c0_9 = arith.constant 0 : index
    %7 = vector.load %arg2[%c0_7, %c0_8, %c1, %c0_9] : memref<1x1x162x4xbf16, #tpu.memory_space<vmem>>, vector<1x1x108x4xbf16>
    %8 = vector.shape_cast %7 : vector<1x1x108x4xbf16> to vector<108x4xbf16>
    %c1_10 = arith.constant 1 : index
    %c0_11 = arith.constant 0 : index
    %c0_12 = arith.constant 0 : index
    %9 = vector.load %arg3[%c1_10, %c0_11, %c0_12] : memref<9x4x128xbf16, #tpu.memory_space<vmem>>, vector<1x4x128xbf16>
    %10 = vector.shape_cast %9 : vector<1x4x128xbf16> to vector<4x128xbf16>
    %cst_13 = arith.constant dense<0.000000e+00> : vector<108x128xf32>
    %11 = tpu.matmul %8, %10, %cst_13 {dimension_numbers = #tpu.dot_dimension_numbers<[1], [0], [0], [1], [0, 0, 1, 1], [], []>} : vector<108x4xbf16>, vector<4x128xbf16>, vector<108x128xf32> -> vector<108x128xf32>
    %12 = arith.addf %6, %11 : vector<108x128xf32>
    %c0_14 = arith.constant 0 : index
    %c0_15 = arith.constant 0 : index
    %c2 = arith.constant 2 : index
    %c0_16 = arith.constant 0 : index
    %13 = vector.load %arg2[%c0_14, %c0_15, %c2, %c0_16] : memref<1x1x162x4xbf16, #tpu.memory_space<vmem>>, vector<1x1x108x4xbf16>
    %14 = vector.shape_cast %13 : vector<1x1x108x4xbf16> to vector<108x4xbf16>
    %c2_17 = arith.constant 2 : index
    %c0_18 = arith.constant 0 : index
    %c0_19 = arith.constant 0 : index
    %15 = vector.load %arg3[%c2_17, %c0_18, %c0_19] : memref<9x4x128xbf16, #tpu.memory_space<vmem>>, vector<1x4x128xbf16>
    %16 = vector.shape_cast %15 : vector<1x4x128xbf16> to vector<4x128xbf16>
    %cst_20 = arith.constant dense<0.000000e+00> : vector<108x128xf32>
    %17 = tpu.matmul %14, %16, %cst_20 {dimension_numbers = #tpu.dot_dimension_numbers<[1], [0], [0], [1], [0, 0, 1, 1], [], []>} : vector<108x4xbf16>, vector<4x128xbf16>, vector<108x128xf32> -> vector<108x128xf32>
    %18 = arith.addf %12, %17 : vector<108x128xf32>
    %c0_21 = arith.constant 0 : index
    %c0_22 = arith.constant 0 : index
    %c18 = arith.constant 18 : index
    %c0_23 = arith.constant 0 : index
    %19 = vector.load %arg2[%c0_21, %c0_22, %c18, %c0_23] : memref<1x1x162x4xbf16, #tpu.memory_space<vmem>>, vector<1x1x108x4xbf16>
    %20 = vector.shape_cast %19 : vector<1x1x108x4xbf16> to vector<108x4xbf16>
    %c3 = arith.constant 3 : index
    %c0_24 = arith.constant 0 : index
    %c0_25 = arith.constant 0 : index
    %21 = vector.load %arg3[%c3, %c0_24, %c0_25] : memref<9x4x128xbf16, #tpu.memory_space<vmem>>, vector<1x4x128xbf16>
    %22 = vector.shape_cast %21 : vector<1x4x128xbf16> to vector<4x128xbf16>
    %cst_26 = arith.constant dense<0.000000e+00> : vector<108x128xf32>
    %23 = tpu.matmul %20, %22, %cst_26 {dimension_numbers = #tpu.dot_dimension_numbers<[1], [0], [0], [1], [0, 0, 1, 1], [], []>} : vector<108x4xbf16>, vector<4x128xbf16>, vector<108x128xf32> -> vector<108x128xf32>
    %24 = arith.addf %18, %23 : vector<108x128xf32>
    %c0_27 = arith.constant 0 : index
    %c0_28 = arith.constant 0 : index
    %c19 = arith.constant 19 : index
    %c0_29 = arith.constant 0 : index
    %25 = vector.load %arg2[%c0_27, %c0_28, %c19, %c0_29] : memref<1x1x162x4xbf16, #tpu.memory_space<vmem>>, vector<1x1x108x4xbf16>
    %26 = vector.shape_cast %25 : vector<1x1x108x4xbf16> to vector<108x4xbf16>
    %c4 = arith.constant 4 : index
    %c0_30 = arith.constant 0 : index
    %c0_31 = arith.constant 0 : index
    %27 = vector.load %arg3[%c4, %c0_30, %c0_31] : memref<9x4x128xbf16, #tpu.memory_space<vmem>>, vector<1x4x128xbf16>
    %28 = vector.shape_cast %27 : vector<1x4x128xbf16> to vector<4x128xbf16>
    %cst_32 = arith.constant dense<0.000000e+00> : vector<108x128xf32>
    %29 = tpu.matmul %26, %28, %cst_32 {dimension_numbers = #tpu.dot_dimension_numbers<[1], [0], [0], [1], [0, 0, 1, 1], [], []>} : vector<108x4xbf16>, vector<4x128xbf16>, vector<108x128xf32> -> vector<108x128xf32>
    %30 = arith.addf %24, %29 : vector<108x128xf32>
    %c0_33 = arith.constant 0 : index
    %c0_34 = arith.constant 0 : index
    %c20 = arith.constant 20 : index
    %c0_35 = arith.constant 0 : index
    %31 = vector.load %arg2[%c0_33, %c0_34, %c20, %c0_35] : memref<1x1x162x4xbf16, #tpu.memory_space<vmem>>, vector<1x1x108x4xbf16>
    %32 = vector.shape_cast %31 : vector<1x1x108x4xbf16> to vector<108x4xbf16>
    %c5 = arith.constant 5 : index
    %c0_36 = arith.constant 0 : index
    %c0_37 = arith.constant 0 : index
    %33 = vector.load %arg3[%c5, %c0_36, %c0_37] : memref<9x4x128xbf16, #tpu.memory_space<vmem>>, vector<1x4x128xbf16>
    %34 = vector.shape_cast %33 : vector<1x4x128xbf16> to vector<4x128xbf16>
    %cst_38 = arith.constant dense<0.000000e+00> : vector<108x128xf32>
    %35 = tpu.matmul %32, %34, %cst_38 {dimension_numbers = #tpu.dot_dimension_numbers<[1], [0], [0], [1], [0, 0, 1, 1], [], []>} : vector<108x4xbf16>, vector<4x128xbf16>, vector<108x128xf32> -> vector<108x128xf32>
    %36 = arith.addf %30, %35 : vector<108x128xf32>
    %c0_39 = arith.constant 0 : index
    %c0_40 = arith.constant 0 : index
    %c36 = arith.constant 36 : index
    %c0_41 = arith.constant 0 : index
    %37 = vector.load %arg2[%c0_39, %c0_40, %c36, %c0_41] : memref<1x1x162x4xbf16, #tpu.memory_space<vmem>>, vector<1x1x108x4xbf16>
    %38 = vector.shape_cast %37 : vector<1x1x108x4xbf16> to vector<108x4xbf16>
    %c6 = arith.constant 6 : index
    %c0_42 = arith.constant 0 : index
    %c0_43 = arith.constant 0 : index
    %39 = vector.load %arg3[%c6, %c0_42, %c0_43] : memref<9x4x128xbf16, #tpu.memory_space<vmem>>, vector<1x4x128xbf16>
    %40 = vector.shape_cast %39 : vector<1x4x128xbf16> to vector<4x128xbf16>
    %cst_44 = arith.constant dense<0.000000e+00> : vector<108x128xf32>
    %41 = tpu.matmul %38, %40, %cst_44 {dimension_numbers = #tpu.dot_dimension_numbers<[1], [0], [0], [1], [0, 0, 1, 1], [], []>} : vector<108x4xbf16>, vector<4x128xbf16>, vector<108x128xf32> -> vector<108x128xf32>
    %42 = arith.addf %36, %41 : vector<108x128xf32>
    %c0_45 = arith.constant 0 : index
    %c0_46 = arith.constant 0 : index
    %c37 = arith.constant 37 : index
    %c0_47 = arith.constant 0 : index
    %43 = vector.load %arg2[%c0_45, %c0_46, %c37, %c0_47] : memref<1x1x162x4xbf16, #tpu.memory_space<vmem>>, vector<1x1x108x4xbf16>
    %44 = vector.shape_cast %43 : vector<1x1x108x4xbf16> to vector<108x4xbf16>
    %c7 = arith.constant 7 : index
    %c0_48 = arith.constant 0 : index
    %c0_49 = arith.constant 0 : index
    %45 = vector.load %arg3[%c7, %c0_48, %c0_49] : memref<9x4x128xbf16, #tpu.memory_space<vmem>>, vector<1x4x128xbf16>
    %46 = vector.shape_cast %45 : vector<1x4x128xbf16> to vector<4x128xbf16>
    %cst_50 = arith.constant dense<0.000000e+00> : vector<108x128xf32>
    %47 = tpu.matmul %44, %46, %cst_50 {dimension_numbers = #tpu.dot_dimension_numbers<[1], [0], [0], [1], [0, 0, 1, 1], [], []>} : vector<108x4xbf16>, vector<4x128xbf16>, vector<108x128xf32> -> vector<108x128xf32>
    %48 = arith.addf %42, %47 : vector<108x128xf32>
    %c0_51 = arith.constant 0 : index
    %c0_52 = arith.constant 0 : index
    %c38 = arith.constant 38 : index
    %c0_53 = arith.constant 0 : index
    %49 = vector.load %arg2[%c0_51, %c0_52, %c38, %c0_53] : memref<1x1x162x4xbf16, #tpu.memory_space<vmem>>, vector<1x1x108x4xbf16>
    %50 = vector.shape_cast %49 : vector<1x1x108x4xbf16> to vector<108x4xbf16>
    %c8 = arith.constant 8 : index
    %c0_54 = arith.constant 0 : index
    %c0_55 = arith.constant 0 : index
    %51 = vector.load %arg3[%c8, %c0_54, %c0_55] : memref<9x4x128xbf16, #tpu.memory_space<vmem>>, vector<1x4x128xbf16>
    %52 = vector.shape_cast %51 : vector<1x4x128xbf16> to vector<4x128xbf16>
    %cst_56 = arith.constant dense<0.000000e+00> : vector<108x128xf32>
    %53 = tpu.matmul %50, %52, %cst_56 {dimension_numbers = #tpu.dot_dimension_numbers<[1], [0], [0], [1], [0, 0, 1, 1], [], []>} : vector<108x4xbf16>, vector<4x128xbf16>, vector<108x128xf32> -> vector<108x128xf32>
    %54 = arith.addf %48, %53 : vector<108x128xf32>
    %c0_57 = arith.constant 0 : index
    %c0_58 = arith.constant 0 : index
    %c0_59 = arith.constant 0 : index
    %c0_60 = arith.constant 0 : index
    %55 = vector.load %arg5[%c0_57, %c0_58, %c0_59, %c0_60] : memref<1x1x108x128xf32, #tpu.memory_space<vmem>>, vector<1x1x108x128xf32>
    %56 = vector.shape_cast %55 : vector<1x1x108x128xf32> to vector<108x128xf32>
    %57 = vector.shape_cast %54 : vector<108x128xf32> to vector<1x1x108x128xf32>
    tpu.vector_store %arg5[%c0_57, %c0_58, %c0_59, %c0_60], %57 {strides = array<i32>} : memref<1x1x108x128xf32, #tpu.memory_space<vmem>>, vector<1x1x108x128xf32>,
    %c0_61 = arith.constant 0 : index
    %c0_62 = arith.constant 0 : index
    %c0_63 = arith.constant 0 : index
    %58 = vector.load %arg4[%c0_61, %c0_62, %c0_63] : memref<1x108x1xf32, #tpu.memory_space<vmem>>, vector<1x108x1xf32>
    %59 = vector.shape_cast %58 : vector<1x108x1xf32> to vector<108x1xf32>
    %60 = vector.broadcast %59 : vector<108x1xf32> to vector<108x128xf32>
    %61 = arith.mulf %54, %60 : vector<108x128xf32>
    %cst_64 = arith.constant dense<0.000000e+00> : vector<128xf32>
    %62 = vector.multi_reduction <add>, %61, %cst_64 [0] : vector<108x128xf32> to vector<128xf32>
    %63 = vector.shape_cast %62 : vector<128xf32> to vector<1x128xf32>
    %c0_65 = arith.constant 0 : index
    %c0_66 = arith.constant 0 : index
    %c0_67 = arith.constant 0 : index
    %c0_68 = arith.constant 0 : index
    %64 = vector.load %arg6[%c0_65, %c0_66, %c0_67, %c0_68] : memref<1x1x2x128xf32, #tpu.memory_space<vmem>>, vector<1x1x1x128xf32>
    %65 = vector.shape_cast %64 : vector<1x1x1x128xf32> to vector<1x128xf32>
    %66 = vector.shape_cast %63 : vector<1x128xf32> to vector<1x1x1x128xf32>
    tpu.vector_store %arg6[%c0_65, %c0_66, %c0_67, %c0_68], %66 {strides = array<i32>} : memref<1x1x2x128xf32, #tpu.memory_space<vmem>>, vector<1x1x1x128xf32>,
    %67 = arith.mulf %61, %54 : vector<108x128xf32>
    %cst_69 = arith.constant dense<0.000000e+00> : vector<128xf32>
    %68 = vector.multi_reduction <add>, %67, %cst_69 [0] : vector<108x128xf32> to vector<128xf32>
    %69 = vector.shape_cast %68 : vector<128xf32> to vector<1x128xf32>
    %c0_70 = arith.constant 0 : index
    %c0_71 = arith.constant 0 : index
    %c1_72 = arith.constant 1 : index
    %c0_73 = arith.constant 0 : index
    %70 = vector.load %arg6[%c0_70, %c0_71, %c1_72, %c0_73] : memref<1x1x2x128xf32, #tpu.memory_space<vmem>>, vector<1x1x1x128xf32>
    %71 = vector.shape_cast %70 : vector<1x1x1x128xf32> to vector<1x128xf32>
    %72 = vector.shape_cast %69 : vector<1x128xf32> to vector<1x1x1x128xf32>
    tpu.vector_store %arg6[%c0_70, %c0_71, %c1_72, %c0_73], %72 {strides = array<i32>} : memref<1x1x2x128xf32, #tpu.memory_space<vmem>>, vector<1x1x1x128xf32>,
    return
  }
  func.func @transform_0(%arg0: i32, %arg1: i32) -> (i32, i32, i32, i32) {
    %c0_i32 = arith.constant 0 : i32
    %c0_i32_0 = arith.constant 0 : i32
    %c0_i32_1 = arith.constant 0 : i32
    return %arg0, %arg1, %c0_i32, %c0_i32_0 : i32, i32, i32, i32
  }
  func.func @transform_1(%arg0: i32, %arg1: i32) -> (i32, i32, i32) {
    %c0_i32 = arith.constant 0 : i32
    %c0_i32_0 = arith.constant 0 : i32
    %c0_i32_1 = arith.constant 0 : i32
    %c0_i32_2 = arith.constant 0 : i32
    return %c0_i32, %c0_i32_0, %c0_i32_1 : i32, i32, i32
  }
  func.func @transform_2(%arg0: i32, %arg1: i32) -> (i32, i32, i32) {
    %c0_i32 = arith.constant 0 : i32
    %c0_i32_0 = arith.constant 0 : i32
    %c0_i32_1 = arith.constant 0 : i32
    return %arg1, %c0_i32, %c0_i32_0 : i32, i32, i32
  }
  func.func @transform_3(%arg0: i32, %arg1: i32) -> (i32, i32, i32, i32) {
    %c0_i32 = arith.constant 0 : i32
    %c0_i32_0 = arith.constant 0 : i32
    %c0_i32_1 = arith.constant 0 : i32
    return %arg0, %arg1, %c0_i32, %c0_i32_0 : i32, i32, i32, i32
  }
  func.func @transform_4(%arg0: i32, %arg1: i32) -> (i32, i32, i32, i32) {
    %c0_i32 = arith.constant 0 : i32
    %c0_i32_0 = arith.constant 0 : i32
    %c0_i32_1 = arith.constant 0 : i32
    return %arg0, %arg1, %c0_i32, %c0_i32_0 : i32, i32, i32, i32
  }
}

</mosaic_0001>

<llo_original>
// kernel: conv_block_forward.3
$region0: #{conv_block_forward.3}
  #allocation0 [shape = 'u32[]', space=smem, size = 0x4, offset = 0x4, fixed_abs, tag = 'smem constant byte address 0x4 - core index']
  #allocation1 [shape = 'u32[144,128]{1,0:T(1,128)}', space=vmem, size = 0x12000, scoped, tag = 'internal scratch']
  %s0 = inlined_call_operand.vmem [shape: f32[2,3,108,128], index: 0, kind: input, shape index: {}]
  %s1 = inlined_call_operand.vmem [shape: f32[1,128], index: 1, kind: input, shape index: {}]
  %s2 = inlined_call_operand.vmem [shape: f32[1,128], index: 2, kind: input, shape index: {}]
  %s3 = inlined_call_operand.vmem [shape: f32[2,3,108,128], index: 3, kind: output, shape index: {}]
  %s4 = sld [smem:[#allocation0]]
  $region45: #{conv_block_forward.3} parent=0
    _
  %s6 = ssub.s32 1, %s4
  %s7 = scalar_select 0, %s6, %s4
  loop: start=0, step=1, limit=8
  $region2: #{conv_block_forward.3} parent=0 // loop_pre_header
    _
  $region3: #{conv_block_forward.3} parent=0 // loop_header
    %s9 = sphi 0, %s13
    %p10 = scmp.ge.s32.totalorder %s9, 8
    %s16 = sphi 0, %s28
    %s17 = sphi 0, %s24
    %s18 = sphi 0, %s16
    %s19 = sphi 0, %s17
    %s20 = sphi 0, %s18
    %s21 = sphi 0, %s19
    %s33 = sphi 0, %s35
    %s36 = sphi 0, %s33
    %s37 = sphi 0, %s36
    %s53 = sphi 0, %s37
    %s57 = sphi 0, %s57
    %s59 = sphi 0, %s57
    %s60 = sphi 0, %s59
    %s74 = sphi 0, %s60
    %s78 = sphi 0, %s78
    %s80 = sphi 0, %s78
    %s81 = sphi 0, %s80
    %s95 = sphi 0, %s81
    %s103 = sphi 0, %s105
    %s106 = sphi 0, %s103
    %s107 = sphi 0, %s106
    %s123 = sphi 0, %s107
  $region4: #{conv_block_forward.3} parent=0 // loop_header_branch
    %12 = sbr.rel (%p10) target = $region8
  $region5: #{conv_block_forward.3} parent=0 // loop_body
    %s14 = ssub.s32 %s9, 1
    %s15 = ssub.s32 %s9, 2
    %s22 = sadd.s32 1, %s17
    %p23 = scmp.ge.s32.totalorder %s22, 3
    %s24 = scalar_select %p23, 0, %s22
    %s25 = sadd.s32 1, %s16
    %s26 = scalar_select %p23, %s25, %s16
    %p27 = scmp.ge.s32.totalorder %s26, 2
    %s28 = scalar_select %p27, 0, %s26
    %s29 = ssub.s32 %s16, %s28
    %s30 = ssub.s32 %s17, %s24
    %s31 = sor.u32 %s29, %s30
    %p32 = scmp.eq.s32.totalorder %s31, 0
    %s34 = sadd.s32 %s33, 1
    %s35 = scalar_select %p32, %s33, %s34
    %p38 = pneg %p32
    %p39 = scmp.eq.s32.totalorder %s9, 5
    %p40 = por %p38, %p39
    %p41 = scmp.ne.s32.totalorder %s33, %s36
    %p42 = scmp.eq.s32.totalorder %s9, 0
    %p43 = por %p41, %p42
    %p44 = scmp.ne.s32.totalorder %s33, %s36
    %p45 = scmp.eq.s32.totalorder %s14, 5
    %p46 = por %p44, %p45
    %p47 = scmp.ne.s32.totalorder %s36, %s37
    %p48 = scmp.eq.s32.totalorder %s14, 0
    %p49 = por %p47, %p48
    %p50 = scmp.ne.s32.totalorder %s36, %s37
    %p51 = scmp.eq.s32.totalorder %s15, 5
    %p52 = por %p50, %p51
    %p54 = scmp.ne.s32.totalorder %s37, %s53
    %p55 = scmp.eq.s32.totalorder %s15, 0
    %p56 = por %p54, %p55
    %s58 = sadd.s32 %s57, 1
    %p61 = scmp.eq.s32.totalorder %s9, 5
    %p62 = scmp.ne.s32.totalorder %s57, %s59
    %p63 = scmp.eq.s32.totalorder %s9, 0
    %p64 = por %p62, %p63
    %p65 = scmp.ne.s32.totalorder %s57, %s59
    %p66 = scmp.eq.s32.totalorder %s14, 5
    %p67 = por %p65, %p66
    %p68 = scmp.ne.s32.totalorder %s59, %s60
    %p69 = scmp.eq.s32.totalorder %s14, 0
    %p70 = por %p68, %p69
    %p71 = scmp.ne.s32.totalorder %s59, %s60
    %p72 = scmp.eq.s32.totalorder %s15, 5
    %p73 = por %p71, %p72
    %p75 = scmp.ne.s32.totalorder %s60, %s74
    %p76 = scmp.eq.s32.totalorder %s15, 0
    %p77 = por %p75, %p76
    %s79 = sadd.s32 %s78, 1
    %p82 = scmp.eq.s32.totalorder %s9, 5
    %p83 = scmp.ne.s32.totalorder %s78, %s80
    %p84 = scmp.eq.s32.totalorder %s9, 0
    %p85 = por %p83, %p84
    %p86 = scmp.ne.s32.totalorder %s78, %s80
    %p87 = scmp.eq.s32.totalorder %s14, 5
    %p88 = por %p86, %p87
    %p89 = scmp.ne.s32.totalorder %s80, %s81
    %p90 = scmp.eq.s32.totalorder %s14, 0
    %p91 = por %p89, %p90
    %p92 = scmp.ne.s32.totalorder %s80, %s81
    %p93 = scmp.eq.s32.totalorder %s15, 5
    %p94 = por %p92, %p93
    %p96 = scmp.ne.s32.totalorder %s81, %s95
    %p97 = scmp.eq.s32.totalorder %s15, 0
    %p98 = por %p96, %p97
    %s99 = ssub.s32 %s16, %s28
    %s100 = ssub.s32 %s17, %s24
    %s101 = sor.u32 %s99, %s100
    %p102 = scmp.eq.s32.totalorder %s101, 0
    %s104 = sadd.s32 %s103, 1
    %s105 = scalar_select %p102, %s103, %s104
    %p108 = pneg %p102
    %p109 = scmp.eq.s32.totalorder %s9, 5
    %p110 = por %p108, %p109
    %p111 = scmp.ne.s32.totalorder %s103, %s106
    %p112 = scmp.eq.s32.totalorder %s9, 0
    %p113 = por %p111, %p112
    %p114 = scmp.ne.s32.totalorder %s103, %s106
    %p115 = scmp.eq.s32.totalorder %s14, 5
    %p116 = por %p114, %p115
    %p117 = scmp.ne.s32.totalorder %s106, %s107
    %p118 = scmp.eq.s32.totalorder %s14, 0
    %p119 = por %p117, %p118
    %p120 = scmp.ne.s32.totalorder %s106, %s107
    %p121 = scmp.eq.s32.totalorder %s15, 5
    %p122 = por %p120, %p121
    %p124 = scmp.ne.s32.totalorder %s107, %s123
    %p125 = scmp.eq.s32.totalorder %s15, 0
    %p126 = por %p124, %p125
    %p127 = scmp.le.s32.totalorder 1, %s9
    %p128 = scmp.lt.s32.totalorder %s9, 7
    %p129 = pnand %p127, %p128
    %p130 = pneg %p129
    // Predicated region
    $region9: #{conv_block_forward.3} parent=5 // pred_check
      _
    $region10: #{conv_block_forward.3} parent=5 // pred_check_branch
      %132 = sbr.rel (%p129) target = $region12
    $region11: #{conv_block_forward.3} parent=5 // pred_region
      %s133 = ssub.s32 %s9, 1
      // Predicated region
      $region13: #{conv_block_forward.3} parent=11 // pred_check
        %p134 = pneg %p70
      $region14: #{conv_block_forward.3} parent=11 // pred_check_branch
        %136 = sbr.rel (%p134) target = $region16
      $region15: #{conv_block_forward.3} parent=11 // pred_region
        _
      $region16: #{conv_block_forward.3} parent=11 // pred_fallthru
        _
      // Predicated region
      $region17: #{conv_block_forward.3} parent=11 // pred_check
        %p137 = pneg %p91
      $region18: #{conv_block_forward.3} parent=11 // pred_check_branch
        %139 = sbr.rel (%p137) target = $region20
      $region19: #{conv_block_forward.3} parent=11 // pred_region
        _
      $region20: #{conv_block_forward.3} parent=11 // pred_fallthru
        _
    $region12: #{conv_block_forward.3} parent=5 // pred_fallthru
      _
    %p140 = scmp.lt.s32.totalorder %s9, 6
    // Predicated region
    $region21: #{conv_block_forward.3} parent=5 // pred_check
      %p141 = pneg %p140
    $region22: #{conv_block_forward.3} parent=5 // pred_check_branch
      %143 = sbr.rel (%p141) target = $region24
    $region23: #{conv_block_forward.3} parent=5 // pred_region
      // Predicated region
      $region25: #{conv_block_forward.3} parent=23 // pred_check
        %p144 = pneg %p43
      $region26: #{conv_block_forward.3} parent=23 // pred_check_branch
        %146 = sbr.rel (%p144) target = $region28
      $region27: #{conv_block_forward.3} parent=23 // pred_region
        %p147 = scmp.lt.s32.totalorder %s16, 1
        %s148 = scalar_select %p147, %s16, 1
        %p149 = scmp.lt.s32.totalorder %s17, 2
        %s150 = scalar_select %p149, %s17, 2
        %s151 = smul.addr %s150, 14
        %s152 = smul.addr %s148, 42
        %s153 = sadd.s32 %s151, %s152
        %s154 = smul.addr %s153, 8
        %s155 = scalar_lea.vmem %s0, %s154
      $region28: #{conv_block_forward.3} parent=23 // pred_fallthru
        _
    $region24: #{conv_block_forward.3} parent=5 // pred_fallthru
      _
    %p156 = scmp.le.s32.totalorder 1, %s9
    %p157 = scmp.lt.s32.totalorder %s9, 7
    %p158 = pnand %p156, %p157
    %p159 = pneg %p158
    // Predicated region
    $region29: #{conv_block_forward.3} parent=5 // pred_check
      _
    $region30: #{conv_block_forward.3} parent=5 // pred_check_branch
      %161 = sbr.rel (%p158) target = $region32
    $region31: #{conv_block_forward.3} parent=5 // pred_region
      %s162 = ssub.s32 %s9, 1
      %p163 = scmp.lt.s32.totalorder %s18, 1
      %s164 = scalar_select %p163, %s18, 1
      %p165 = scmp.lt.s32.totalorder %s19, 2
      %s166 = scalar_select %p165, %s19, 2
      %s167 = smul.addr %s166, 14
      %s168 = smul.addr %s164, 42
      %s169 = sadd.s32 %s167, %s168
      %s170 = smul.addr %s169, 8
      %s171 = scalar_lea.vmem %s0, %s170
      %p172 = pneg %p49
      %p173 = pneg %p46
      %p174 = pneg %p70
      %p175 = pneg %p67
      %p176 = pneg %p91
      %p177 = pneg %p88
      %p178 = pneg %p119
      %p179 = pneg %p116
      %p180 = scmp.lt.s32.totalorder %s18, 1
      %s181 = scalar_select %p180, %s18, 1
      %p182 = scmp.lt.s32.totalorder %s19, 2
      %s183 = scalar_select %p182, %s19, 2
      %s184 = smul.addr %s183, 14
      %s185 = smul.addr %s181, 42
      %s186 = sadd.s32 %s184, %s185
      %s187 = smul.addr %s186, 8
      %s188 = scalar_lea.vmem %s3, %s187
      %p189 = scmp.lt.s32.totalorder %s18, 1
      %s190 = scalar_select %p189, %s18, 1
      %p191 = scmp.lt.s32.totalorder %s19, 2
      %s192 = scalar_select %p191, %s19, 2
      %s193 = smul.addr %s192, 14
      %s194 = smul.addr %s190, 42
      %s195 = sadd.s32 %s193, %s194
      %s196 = smul.addr %s195, 8
      %s197 = scalar_lea.vmem %s0, %s196
      %p198 = scmp.lt.s32.totalorder %s18, 1
      %s199 = scalar_select %p198, %s18, 1
      %p200 = scmp.lt.s32.totalorder %s19, 2
      %s201 = scalar_select %p200, %s19, 2
      %s202 = smul.addr %s201, 14
      %s203 = smul.addr %s199, 42
      %s204 = sadd.s32 %s202, %s203
      %s205 = smul.addr %s204, 8
      %s206 = scalar_lea.vmem %s3, %s205
      %v207 = vld [vmem:[%s197] sm:$0xff]
      %v208 = vld [vmem:[%s197 + $0x8] sm:$0xff]
      %v209 = vld [vmem:[%s197 + $0x10] sm:$0xff]
      %v210 = vld [vmem:[%s197 + $0x18] sm:$0xff]
      %v211 = vld [vmem:[%s197 + $0x20] sm:$0xff]
      %v212 = vld [vmem:[%s197 + $0x28] sm:$0xff]
      %v213 = vld [vmem:[%s197 + $0x30] sm:$0xff]
      %v214 = vld [vmem:[%s197 + $0x38] sm:$0xff]
      %v215 = vld [vmem:[%s197 + $0x40] sm:$0xff]
      %v216 = vld [vmem:[%s197 + $0x48] sm:$0xff]
      %v217 = vld [vmem:[%s197 + $0x50] sm:$0xff]
      %v218 = vld [vmem:[%s197 + $0x58] sm:$0xff]
      %v219 = vld [vmem:[%s197 + $0x60] sm:$0xff]
      %v220 = vld [vmem:[%s197 + $0x68] sm:$0xf]
      %v221 = vld [vmem:[%s1] sm:$0x1]
      %v223 = vlaneseq
      %v224 = vshrl.u32 %v223, 7
      %v225 = vsub.s32 0, %v224
      %v226 = vrot.slane %v221, %v225
      %v228 = vmul.f32 %v207, %v226
      %v229 = vmul.f32 %v208, %v226
      %v230 = vmul.f32 %v209, %v226
      %v231 = vmul.f32 %v210, %v226
      %v232 = vmul.f32 %v211, %v226
      %v233 = vmul.f32 %v212, %v226
      %v234 = vmul.f32 %v213, %v226
      %v235 = vmul.f32 %v214, %v226
      %v236 = vmul.f32 %v215, %v226
      %v237 = vmul.f32 %v216, %v226
      %v238 = vmul.f32 %v217, %v226
      %v239 = vmul.f32 %v218, %v226
      %v240 = vmul.f32 %v219, %v226
      %v241 = vmul.f32 %v220, %v226
      %v242 = vld [vmem:[%s2] sm:$0x1]
      %v244 = vlaneseq
      %v245 = vshrl.u32 %v244, 7
      %v246 = vsub.s32 0, %v245
      %v247 = vrot.slane %v242, %v246
      %v249 = vadd.f32 %v228, %v247
      %v250 = vadd.f32 %v229, %v247
      %v251 = vadd.f32 %v230, %v247
      %v252 = vadd.f32 %v231, %v247
      %v253 = vadd.f32 %v232, %v247
      %v254 = vadd.f32 %v233, %v247
      %v255 = vadd.f32 %v234, %v247
      %v256 = vadd.f32 %v235, %v247
      %v257 = vadd.f32 %v236, %v247
      %v258 = vadd.f32 %v237, %v247
      %v259 = vadd.f32 %v238, %v247
      %v260 = vadd.f32 %v239, %v247
      %v261 = vadd.f32 %v240, %v247
      %v262 = vadd.f32 %v241, %v247
      %v263 = vmax.f32 %v249, 0.0
      %v264 = vmax.f32 %v250, 0.0
      %v265 = vmax.f32 %v251, 0.0
      %v266 = vmax.f32 %v252, 0.0
      %v267 = vmax.f32 %v253, 0.0
      %v268 = vmax.f32 %v254, 0.0
      %v269 = vmax.f32 %v255, 0.0
      %v270 = vmax.f32 %v256, 0.0
      %v271 = vmax.f32 %v257, 0.0
      %v272 = vmax.f32 %v258, 0.0
      %v273 = vmax.f32 %v259, 0.0
      %v274 = vmax.f32 %v260, 0.0
      %v275 = vmax.f32 %v261, 0.0
      %v276 = vmax.f32 %v262, 0.0
      %v277 = vmin.f32 %v263, 6.0
      %v278 = vmin.f32 %v264, 6.0
      %v279 = vmin.f32 %v265, 6.0
      %v280 = vmin.f32 %v266, 6.0
      %v281 = vmin.f32 %v267, 6.0
      %v282 = vmin.f32 %v268, 6.0
      %v283 = vmin.f32 %v269, 6.0
      %v284 = vmin.f32 %v270, 6.0
      %v285 = vmin.f32 %v271, 6.0
      %v286 = vmin.f32 %v272, 6.0
      %v287 = vmin.f32 %v273, 6.0
      %v288 = vmin.f32 %v274, 6.0
      %v289 = vmin.f32 %v275, 6.0
      %v290 = vmin.f32 %v276, 6.0
      %291 = vst [vmem:[%s206] sm:$0xff] %v277
      %292 = vst [vmem:[%s206 + $0x8] sm:$0xff] %v278
      %293 = vst [vmem:[%s206 + $0x10] sm:$0xff] %v279
      %294 = vst [vmem:[%s206 + $0x18] sm:$0xff] %v280
      %295 = vst [vmem:[%s206 + $0x20] sm:$0xff] %v281
      %296 = vst [vmem:[%s206 + $0x28] sm:$0xff] %v282
      %297 = vst [vmem:[%s206 + $0x30] sm:$0xff] %v283
      %298 = vst [vmem:[%s206 + $0x38] sm:$0xff] %v284
      %299 = vst [vmem:[%s206 + $0x40] sm:$0xff] %v285
      %300 = vst [vmem:[%s206 + $0x48] sm:$0xff] %v286
      %301 = vst [vmem:[%s206 + $0x50] sm:$0xff] %v287
      %302 = vst [vmem:[%s206 + $0x58] sm:$0xff] %v288
      %303 = vst [vmem:[%s206 + $0x60] sm:$0xff] %v289
      %304 = vst [vmem:[%s206 + $0x68] sm:$0xf] %v290
      %p305 = scmp.lt.s32.totalorder %s18, 1
      %s306 = scalar_select %p305, %s18, 1
      %p307 = scmp.lt.s32.totalorder %s19, 2
      %s308 = scalar_select %p307, %s19, 2
      %s309 = smul.addr %s308, 14
      %s310 = smul.addr %s306, 42
      %s311 = sadd.s32 %s309, %s310
      %s312 = smul.addr %s311, 8
      %s313 = scalar_lea.vmem %s3, %s312
      // Predicated region
      $region33: #{conv_block_forward.3} parent=31 // pred_check
        %p314 = pneg %p116
      $region34: #{conv_block_forward.3} parent=31 // pred_check_branch
        %316 = sbr.rel (%p314) target = $region36
      $region35: #{conv_block_forward.3} parent=31 // pred_region
        _
      $region36: #{conv_block_forward.3} parent=31 // pred_fallthru
        _
    $region32: #{conv_block_forward.3} parent=5 // pred_fallthru
      _
    %p317 = scmp.le.s32.totalorder 2, %s9
    // Predicated region
    $region37: #{conv_block_forward.3} parent=5 // pred_check
      %p318 = pneg %p317
    $region38: #{conv_block_forward.3} parent=5 // pred_check_branch
      %320 = sbr.rel (%p318) target = $region40
    $region39: #{conv_block_forward.3} parent=5 // pred_region
      %s321 = ssub.s32 %s9, 2
      // Predicated region
      $region41: #{conv_block_forward.3} parent=39 // pred_check
        %p322 = pneg %p122
      $region42: #{conv_block_forward.3} parent=39 // pred_check_branch
        %324 = sbr.rel (%p322) target = $region44
      $region43: #{conv_block_forward.3} parent=39 // pred_region
        %p325 = scmp.lt.s32.totalorder %s20, 1
        %s326 = scalar_select %p325, %s20, 1
        %p327 = scmp.lt.s32.totalorder %s21, 2
        %s328 = scalar_select %p327, %s21, 2
        %s329 = smul.addr %s328, 14
        %s330 = smul.addr %s326, 42
        %s331 = sadd.s32 %s329, %s330
        %s332 = smul.addr %s331, 8
        %s333 = scalar_lea.vmem %s3, %s332
      $region44: #{conv_block_forward.3} parent=39 // pred_fallthru
        _
    $region40: #{conv_block_forward.3} parent=5 // pred_fallthru
      _
  $region6: #{conv_block_forward.3} parent=0 // loop_footer
    %s13 = sadd.s32 1, %s9
  $region7: #{conv_block_forward.3} parent=0 // loop_footer_branch
    %8 = sbr.rel target = $region3
  $region8: #{conv_block_forward.3} parent=0 // loop_exit
    _

// kernel: conv_block_forward.2
$region0: #{conv_block_forward.2}
  #allocation0 [shape = 'u32[]', space=smem, size = 0x4, offset = 0x4, fixed_abs, tag = 'smem constant byte address 0x4 - core index']
  #allocation1 [shape = 'u32[144,128]{1,0:T(1,128)}', space=vmem, size = 0x12000, scoped, tag = 'internal scratch']
  %s0 = inlined_call_operand.vmem [shape: bf16[2,3,162,4], index: 0, kind: input, shape index: {}]
  %s1 = inlined_call_operand.vmem [shape: bf16[9,4,128], index: 1, kind: input, shape index: {}]
  %s2 = inlined_call_operand.vmem [shape: f32[3,108,1], index: 2, kind: input, shape index: {}]
  %s3 = inlined_call_operand.vmem [shape: f32[2,3,108,128], index: 3, kind: output, shape index: {0}]
  %s4 = inlined_call_operand.vmem [shape: f32[2,3,2,128], index: 4, kind: output, shape index: {1}]
  %5 = xla_tuple %s3, %s4
  %s6 = sld [smem:[#allocation0]]
  $region53: #{conv_block_forward.2} parent=0
    _
  %s8 = ssub.s32 1, %s6
  %s9 = scalar_select 0, %s8, %s6
  loop: start=0, step=1, limit=8
  $region2: #{conv_block_forward.2} parent=0 // loop_pre_header
    _
  $region3: #{conv_block_forward.2} parent=0 // loop_header
    %s11 = sphi 0, %s15
    %p12 = scmp.ge.s32.totalorder %s11, 8
    %s18 = sphi 0, %s30
    %s19 = sphi 0, %s26
    %s20 = sphi 0, %s18
    %s21 = sphi 0, %s19
    %s22 = sphi 0, %s20
    %s23 = sphi 0, %s21
    %s35 = sphi 0, %s37
    %s38 = sphi 0, %s35
    %s39 = sphi 0, %s38
    %s55 = sphi 0, %s39
    %s59 = sphi 0, %s59
    %s61 = sphi 0, %s59
    %s62 = sphi 0, %s61
    %s76 = sphi 0, %s62
    %s82 = sphi 0, %s84
    %s85 = sphi 0, %s82
    %s86 = sphi 0, %s85
    %s102 = sphi 0, %s86
    %s110 = sphi 0, %s112
    %s113 = sphi 0, %s110
    %s114 = sphi 0, %s113
    %s130 = sphi 0, %s114
    %s138 = sphi 0, %s140
    %s141 = sphi 0, %s138
    %s142 = sphi 0, %s141
    %s158 = sphi 0, %s142
  $region4: #{conv_block_forward.2} parent=0 // loop_header_branch
    %14 = sbr.rel (%p12) target = $region8
  $region5: #{conv_block_forward.2} parent=0 // loop_body
    %s16 = ssub.s32 %s11, 1
    %s17 = ssub.s32 %s11, 2
    %s24 = sadd.s32 1, %s19
    %p25 = scmp.ge.s32.totalorder %s24, 3
    %s26 = scalar_select %p25, 0, %s24
    %s27 = sadd.s32 1, %s18
    %s28 = scalar_select %p25, %s27, %s18
    %p29 = scmp.ge.s32.totalorder %s28, 2
    %s30 = scalar_select %p29, 0, %s28
    %s31 = ssub.s32 %s18, %s30
    %s32 = ssub.s32 %s19, %s26
    %s33 = sor.u32 %s31, %s32
    %p34 = scmp.eq.s32.totalorder %s33, 0
    %s36 = sadd.s32 %s35, 1
    %s37 = scalar_select %p34, %s35, %s36
    %p40 = pneg %p34
    %p41 = scmp.eq.s32.totalorder %s11, 5
    %p42 = por %p40, %p41
    %p43 = scmp.ne.s32.totalorder %s35, %s38
    %p44 = scmp.eq.s32.totalorder %s11, 0
    %p45 = por %p43, %p44
    %p46 = scmp.ne.s32.totalorder %s35, %s38
    %p47 = scmp.eq.s32.totalorder %s16, 5
    %p48 = por %p46, %p47
    %p49 = scmp.ne.s32.totalorder %s38, %s39
    %p50 = scmp.eq.s32.totalorder %s16, 0
    %p51 = por %p49, %p50
    %p52 = scmp.ne.s32.totalorder %s38, %s39
    %p53 = scmp.eq.s32.totalorder %s17, 5
    %p54 = por %p52, %p53
    %p56 = scmp.ne.s32.totalorder %s39, %s55
    %p57 = scmp.eq.s32.totalorder %s17, 0
    %p58 = por %p56, %p57
    %s60 = sadd.s32 %s59, 1
    %p63 = scmp.eq.s32.totalorder %s11, 5
    %p64 = scmp.ne.s32.totalorder %s59, %s61
    %p65 = scmp.eq.s32.totalorder %s11, 0
    %p66 = por %p64, %p65
    %p67 = scmp.ne.s32.totalorder %s59, %s61
    %p68 = scmp.eq.s32.totalorder %s16, 5
    %p69 = por %p67, %p68
    %p70 = scmp.ne.s32.totalorder %s61, %s62
    %p71 = scmp.eq.s32.totalorder %s16, 0
    %p72 = por %p70, %p71
    %p73 = scmp.ne.s32.totalorder %s61, %s62
    %p74 = scmp.eq.s32.totalorder %s17, 5
    %p75 = por %p73, %p74
    %p77 = scmp.ne.s32.totalorder %s62, %s76
    %p78 = scmp.eq.s32.totalorder %s17, 0
    %p79 = por %p77, %p78
    %s80 = ssub.s32 %s19, %s26
    %p81 = scmp.eq.s32.totalorder %s80, 0
    %s83 = sadd.s32 %s82, 1
    %s84 = scalar_select %p81, %s82, %s83
    %p87 = pneg %p81
    %p88 = scmp.eq.s32.totalorder %s11, 5
    %p89 = por %p87, %p88
    %p90 = scmp.ne.s32.totalorder %s82, %s85
    %p91 = scmp.eq.s32.totalorder %s11, 0
    %p92 = por %p90, %p91
    %p93 = scmp.ne.s32.totalorder %s82, %s85
    %p94 = scmp.eq.s32.totalorder %s16, 5
    %p95 = por %p93, %p94
    %p96 = scmp.ne.s32.totalorder %s85, %s86
    %p97 = scmp.eq.s32.totalorder %s16, 0
    %p98 = por %p96, %p97
    %p99 = scmp.ne.s32.totalorder %s85, %s86
    %p100 = scmp.eq.s32.totalorder %s17, 5
    %p101 = por %p99, %p100
    %p103 = scmp.ne.s32.totalorder %s86, %s102
    %p104 = scmp.eq.s32.totalorder %s17, 0
    %p105 = por %p103, %p104
    %s106 = ssub.s32 %s18, %s30
    %s107 = ssub.s32 %s19, %s26
    %s108 = sor.u32 %s106, %s107
    %p109 = scmp.eq.s32.totalorder %s108, 0
    %s111 = sadd.s32 %s110, 1
    %s112 = scalar_select %p109, %s110, %s111
    %p115 = pneg %p109
    %p116 = scmp.eq.s32.totalorder %s11, 5
    %p117 = por %p115, %p116
    %p118 = scmp.ne.s32.totalorder %s110, %s113
    %p119 = scmp.eq.s32.totalorder %s11, 0
    %p120 = por %p118, %p119
    %p121 = scmp.ne.s32.totalorder %s110, %s113
    %p122 = scmp.eq.s32.totalorder %s16, 5
    %p123 = por %p121, %p122
    %p124 = scmp.ne.s32.totalorder %s113, %s114
    %p125 = scmp.eq.s32.totalorder %s16, 0
    %p126 = por %p124, %p125
    %p127 = scmp.ne.s32.totalorder %s113, %s114
    %p128 = scmp.eq.s32.totalorder %s17, 5
    %p129 = por %p127, %p128
    %p131 = scmp.ne.s32.totalorder %s114, %s130
    %p132 = scmp.eq.s32.totalorder %s17, 0
    %p133 = por %p131, %p132
    %s134 = ssub.s32 %s18, %s30
    %s135 = ssub.s32 %s19, %s26
    %s136 = sor.u32 %s134, %s135
    %p137 = scmp.eq.s32.totalorder %s136, 0
    %s139 = sadd.s32 %s138, 1
    %s140 = scalar_select %p137, %s138, %s139
    %p143 = pneg %p137
    %p144 = scmp.eq.s32.totalorder %s11, 5
    %p145 = por %p143, %p144
    %p146 = scmp.ne.s32.totalorder %s138, %s141
    %p147 = scmp.eq.s32.totalorder %s11, 0
    %p148 = por %p146, %p147
    %p149 = scmp.ne.s32.totalorder %s138, %s141
    %p150 = scmp.eq.s32.totalorder %s16, 5
    %p151 = por %p149, %p150
    %p152 = scmp.ne.s32.totalorder %s141, %s142
    %p153 = scmp.eq.s32.totalorder %s16, 0
    %p154 = por %p152, %p153
    %p155 = scmp.ne.s32.totalorder %s141, %s142
    %p156 = scmp.eq.s32.totalorder %s17, 5
    %p157 = por %p155, %p156
    %p159 = scmp.ne.s32.totalorder %s142, %s158
    %p160 = scmp.eq.s32.totalorder %s17, 0
    %p161 = por %p159, %p160
    %p162 = scmp.le.s32.totalorder 1, %s11
    %p163 = scmp.lt.s32.totalorder %s11, 7
    %p164 = pnand %p162, %p163
    %p165 = pneg %p164
    // Predicated region
    $region9: #{conv_block_forward.2} parent=5 // pred_check
      _
    $region10: #{conv_block_forward.2} parent=5 // pred_check_branch
      %167 = sbr.rel (%p164) target = $region12
    $region11: #{conv_block_forward.2} parent=5 // pred_region
      %s168 = ssub.s32 %s11, 1
      // Predicated region
      $region13: #{conv_block_forward.2} parent=11 // pred_check
        %p169 = pneg %p72
      $region14: #{conv_block_forward.2} parent=11 // pred_check_branch
        %171 = sbr.rel (%p169) target = $region16
      $region15: #{conv_block_forward.2} parent=11 // pred_region
        _
      $region16: #{conv_block_forward.2} parent=11 // pred_fallthru
        _
    $region12: #{conv_block_forward.2} parent=5 // pred_fallthru
      _
    %p172 = scmp.lt.s32.totalorder %s11, 6
    // Predicated region
    $region17: #{conv_block_forward.2} parent=5 // pred_check
      %p173 = pneg %p172
    $region18: #{conv_block_forward.2} parent=5 // pred_check_branch
      %175 = sbr.rel (%p173) target = $region20
    $region19: #{conv_block_forward.2} parent=5 // pred_region
      // Predicated region
      $region21: #{conv_block_forward.2} parent=19 // pred_check
        %p176 = pneg %p45
      $region22: #{conv_block_forward.2} parent=19 // pred_check_branch
        %178 = sbr.rel (%p176) target = $region24
      $region23: #{conv_block_forward.2} parent=19 // pred_region
        %p179 = scmp.lt.s32.totalorder %s18, 1
        %s180 = scalar_select %p179, %s18, 1
        %p181 = scmp.lt.s32.totalorder %s19, 2
        %s182 = scalar_select %p181, %s19, 2
        %s183 = smul.addr %s182, 21
        %s184 = smul.addr %s180, 63
        %s185 = sadd.s32 %s183, %s184
        %s186 = smul.addr %s185, 4
        %s187 = scalar_lea.vmem %s0, %s186
      $region24: #{conv_block_forward.2} parent=19 // pred_fallthru
        _
      // Predicated region
      $region25: #{conv_block_forward.2} parent=19 // pred_check
        %p188 = pneg %p92
      $region26: #{conv_block_forward.2} parent=19 // pred_check_branch
        %190 = sbr.rel (%p188) target = $region28
      $region27: #{conv_block_forward.2} parent=19 // pred_region
        %p191 = scmp.lt.s32.totalorder %s19, 2
        %s192 = scalar_select %p191, %s19, 2
        %s193 = smul.addr %s192, 14
        %s194 = smul.addr %s193, 8
        %s195 = scalar_lea.vmem %s2, %s194
      $region28: #{conv_block_forward.2} parent=19 // pred_fallthru
        _
    $region20: #{conv_block_forward.2} parent=5 // pred_fallthru
      _
    %p196 = scmp.le.s32.totalorder 1, %s11
    %p197 = scmp.lt.s32.totalorder %s11, 7
    %p198 = pnand %p196, %p197
    %p199 = pneg %p198
    // Predicated region
    $region29: #{conv_block_forward.2} parent=5 // pred_check
      _
    $region30: #{conv_block_forward.2} parent=5 // pred_check_branch
      %201 = sbr.rel (%p198) target = $region32
    $region31: #{conv_block_forward.2} parent=5 // pred_region
      %s202 = ssub.s32 %s11, 1
      %p203 = scmp.lt.s32.totalorder %s20, 1
      %s204 = scalar_select %p203, %s20, 1
      %p205 = scmp.lt.s32.totalorder %s21, 2
      %s206 = scalar_select %p205, %s21, 2
      %s207 = smul.addr %s206, 21
      %s208 = smul.addr %s204, 63
      %s209 = sadd.s32 %s207, %s208
      %s210 = smul.addr %s209, 4
      %s211 = scalar_lea.vmem %s0, %s210
      %p212 = pneg %p51
      %p213 = pneg %p48
      %p214 = pneg %p72
      %p215 = pneg %p69
      %p216 = scmp.lt.s32.totalorder %s21, 2
      %s217 = scalar_select %p216, %s21, 2
      %s218 = smul.addr %s217, 14
      %s219 = smul.addr %s218, 8
      %s220 = scalar_lea.vmem %s2, %s219
      %p221 = pneg %p98
      %p222 = pneg %p95
      %p223 = pneg %p126
      %p224 = pneg %p123
      %p225 = scmp.lt.s32.totalorder %s20, 1
      %s226 = scalar_select %p225, %s20, 1
      %p227 = scmp.lt.s32.totalorder %s21, 2
      %s228 = scalar_select %p227, %s21, 2
      %s229 = smul.addr %s228, 14
      %s230 = smul.addr %s226, 42
      %s231 = sadd.s32 %s229, %s230
      %s232 = smul.addr %s231, 8
      %s233 = scalar_lea.vmem %s3, %s232
      %p234 = pneg %p154
      %p235 = pneg %p151
      %p236 = scmp.lt.s32.totalorder %s20, 1
      %s237 = scalar_select %p236, %s20, 1
      %p238 = scmp.lt.s32.totalorder %s21, 2
      %s239 = scalar_select %p238, %s21, 2
      %s240 = smul.addr %s237, 3
      %s241 = sadd.s32 %s239, %s240
      %s242 = smul.addr %s241, 2
      %s243 = scalar_lea.vmem %s4, %s242
      %p244 = scmp.lt.s32.totalorder %s20, 1
      %s245 = scalar_select %p244, %s20, 1
      %p246 = scmp.lt.s32.totalorder %s21, 2
      %s247 = scalar_select %p246, %s21, 2
      %s248 = smul.addr %s247, 21
      %s249 = smul.addr %s245, 63
      %s250 = sadd.s32 %s248, %s249
      %s251 = smul.addr %s250, 4
      %s252 = scalar_lea.vmem %s0, %s251
      %p253 = scmp.lt.s32.totalorder %s21, 2
      %s254 = scalar_select %p253, %s21, 2
      %s255 = smul.addr %s254, 14
      %s256 = smul.addr %s255, 8
      %s257 = scalar_lea.vmem %s2, %s256
      %p258 = scmp.lt.s32.totalorder %s20, 1
      %s259 = scalar_select %p258, %s20, 1
      %p260 = scmp.lt.s32.totalorder %s21, 2
      %s261 = scalar_select %p260, %s21, 2
      %s262 = smul.addr %s261, 14
      %s263 = smul.addr %s259, 42
      %s264 = sadd.s32 %s262, %s263
      %s265 = smul.addr %s264, 8
      %s266 = scalar_lea.vmem %s3, %s265
      %p267 = scmp.lt.s32.totalorder %s20, 1
      %s268 = scalar_select %p267, %s20, 1
      %p269 = scmp.lt.s32.totalorder %s21, 2
      %s270 = scalar_select %p269, %s21, 2
      %s271 = smul.addr %s268, 3
      %s272 = sadd.s32 %s270, %s271
      %s273 = smul.addr %s272, 2
      %s274 = scalar_lea.vmem %s4, %s273
      %v276 = vld [vmem:[%s252] sm:$0xf]
      %v277 = vld [vmem:[%s252 + $0x4] sm:$0xf]
      %v278 = vld [vmem:[%s252 + $0x8] sm:$0xf]
      %v279 = vld [vmem:[%s252 + $0xc] sm:$0xf]
      %v280 = vld [vmem:[%s252 + $0x10] sm:$0xf]
      %v281 = vld [vmem:[%s252 + $0x14] sm:$0xf]
      %v282 = vld [vmem:[%s252 + $0x18] sm:$0xf]
      %v283 = vld [vmem:[%s252 + $0x1c] sm:$0xf]
      %v284 = vld [vmem:[%s252 + $0x20] sm:$0xf]
      %v285 = vld [vmem:[%s252 + $0x24] sm:$0xf]
      %v286 = vld [vmem:[%s252 + $0x28] sm:$0xf]
      %v287 = vld [vmem:[%s252 + $0x2c] sm:$0xf]
      %v288 = vld [vmem:[%s252 + $0x30] sm:$0xf]
      %v289 = vld [vmem:[%s252 + $0x34] sm:$0x3]
      %v290 = vld [vmem:[%s1] sm:$0x3]
      %v291 = vld [vmem:[%s252 + $0x34] sm:$0x7]
      %s292 = scalar_lea.vmem %s1, 2
      %v293 = vld [vmem:[%s292] sm:$0x3]
      %v308 = vunpack.c.l.b16 %v276
      %v309 = vunpack.c.l.b16 %v277
      %v310 = vunpack.c.l.b16 %v278
      %v311 = vunpack.c.l.b16 %v279
      %v312 = vunpack.c.l.b16 %v280
      %v313 = vunpack.c.l.b16 %v281
      %v314 = vunpack.c.l.b16 %v282
      %v315 = vunpack.c.l.b16 %v283
      %v316 = vunpack.c.l.b16 %v284
      %v317 = vunpack.c.l.b16 %v285
      %v318 = vunpack.c.l.b16 %v286
      %v319 = vunpack.c.l.b16 %v287
      %v320 = vunpack.c.l.b16 %v288
      %v321 = vunpack.c.l.b16 %v291
      %v322 = vpack.c.b16 %v309, %v308
      %v323 = vpack.c.b16 %v311, %v310
      %v324 = vpack.c.b16 %v313, %v312
      %v325 = vpack.c.b16 %v315, %v314
      %v326 = vpack.c.b16 %v317, %v316
      %v327 = vpack.c.b16 %v319, %v318
      %v328 = vpack.c.b16 %v321, %v320
      %vm329 = vsmask.f32 7424
      %v331 = vshrl.u32 %v322, 16
      %v333 = vshll.u32 %v322, 16
      %v335 = vrot.slane %v333, 1
      %v336 = vor.u32 %v331, %v335
      %v338 = vshll.u32 %v323, 16
      %v340 = vrot.slane %v338, 1
      %v341 = vsel %vm329, %v336, %v340
      %v342 = vshrl.u32 %v323, 16
      %v344 = vor.u32 %v342, %v340
      %v346 = vshll.u32 %v324, 16
      %v348 = vrot.slane %v346, 1
      %v349 = vsel %vm329, %v344, %v348
      %v350 = vshrl.u32 %v324, 16
      %v352 = vor.u32 %v350, %v348
      %v354 = vshll.u32 %v325, 16
      %v356 = vrot.slane %v354, 1
      %v357 = vsel %vm329, %v352, %v356
      %v358 = vshrl.u32 %v325, 16
      %v360 = vor.u32 %v358, %v356
      %v362 = vshll.u32 %v326, 16
      %v364 = vrot.slane %v362, 1
      %v365 = vsel %vm329, %v360, %v364
      %v366 = vshrl.u32 %v326, 16
      %v368 = vor.u32 %v366, %v364
      %v370 = vshll.u32 %v327, 16
      %v372 = vrot.slane %v370, 1
      %v373 = vsel %vm329, %v368, %v372
      %v374 = vshrl.u32 %v327, 16
      %v376 = vor.u32 %v374, %v372
      %v378 = vshll.u32 %v328, 16
      %v380 = vrot.slane %v378, 1
      %v381 = vsel %vm329, %v376, %v380
      %v382 = vshrl.u32 %v328, 16
      %v384 = vor.u32 %v382, %v380
      %vm385 = vcmask 31744
      %v387 = vsel %vm385, %v341, 0
      %v390 = vsel %vm385, %v349, 0
      %v393 = vsel %vm385, %v357, 0
      %v396 = vsel %vm385, %v365, 0
      %v399 = vsel %vm385, %v373, 0
      %v402 = vsel %vm385, %v381, 0
      %v405 = vsel %vm385, %v384, 0
      %vm407 = vcmask 1041408
      %v409 = vsel %vm407, %v293, 0
      %411 = vmatprep.subr.bf16.mxu0 0
      %412 = vmatpush1.bf16.msra.mxu0 0
      %413 = vmatprep.subr.bf16.mxu0 0
      %414 = vmatpush1.bf16.msra.mxu0 0
      %415 = vmatprep.subr.bf16.mxu0 0
      %416 = vmatpush1.bf16.msra.mxu0 0
      %417 = vmatprep.subr.bf16.mxu0 0
      %418 = vmatpush1.bf16.msra.mxu0 0
      %419 = vmatprep.subr.bf16.mxu0 0
      %420 = vmatpush1.bf16.msra.mxu0 0
      %421 = vmatprep.subr.bf16.mxu0 0
      %422 = vmatpush1.bf16.msra.mxu0 0
      %423 = vmatprep.subr.bf16.mxu0 0
      %424 = vmatpush1.bf16.msra.mxu0 0
      %425 = vmatprep.subr.bf16.mxu0 0
      %426 = vmatpush1.bf16.msra.mxu0 %v409
      %427 = vmatprep.subr.bf16.mxu0 0
      %428 = vmatpush2.bf16.msra.mxu0 0
      %429 = vmatprep.subr.bf16.mxu0 0
      %430 = vmatpush2.bf16.msra.mxu0 0
      %431 = vmatprep.subr.bf16.mxu0 0
      %432 = vmatpush2.bf16.msra.mxu0 0
      %433 = vmatprep.subr.bf16.mxu0 0
      %434 = vmatpush2.bf16.msra.mxu0 0
      %435 = vmatprep.subr.bf16.mxu0 0
      %436 = vmatpush2.bf16.msra.mxu0 0
      %437 = vmatprep.subr.bf16.mxu0 0
      %438 = vmatpush2.bf16.msra.mxu0 0
      %439 = vmatprep.subr.bf16.mxu0 0
      %440 = vmatpush2.bf16.msra.mxu0 0
      %441 = vmatprep.subr.bf16.mxu0 0
      %442 = vmatpush2.bf16.msra.mxu0 0
      %443 = vmatprep.mubr.bf16.mxu0 0
      %444 = vmatmul.mubr.bf16.gmra.mxu0 %v387
      %v445 = vpop.f32.mrf.mxu0
      %v446 = vadd.f32 0.0, %v445
      %v447 = vpop.f32.mrf.mxu0
      %v448 = vpop.f32.mrf.mxu0
      %v449 = vadd.f32 0.0, %v448
      %v450 = vpop.f32.mrf.mxu0
      %451 = vmatprep.mubr.bf16.mxu0 0
      %452 = vmatmul.mubr.bf16.gmra.mxu0 %v390
      %v453 = vpop.f32.mrf.mxu0
      %v454 = vadd.f32 0.0, %v453
      %v455 = vpop.f32.mrf.mxu0
      %v456 = vpop.f32.mrf.mxu0
      %v457 = vadd.f32 0.0, %v456
      %v458 = vpop.f32.mrf.mxu0
      %459 = vmatprep.mubr.bf16.mxu0 0
      %460 = vmatmul.mubr.bf16.gmra.mxu0 %v393
      %v461 = vpop.f32.mrf.mxu0
      %v462 = vadd.f32 0.0, %v461
      %v463 = vpop.f32.mrf.mxu0
      %v464 = vpop.f32.mrf.mxu0
      %v465 = vadd.f32 0.0, %v464
      %v466 = vpop.f32.mrf.mxu0
      %467 = vmatprep.mubr.bf16.mxu0 0
      %468 = vmatmul.mubr.bf16.gmra.mxu0 %v396
      %v469 = vpop.f32.mrf.mxu0
      %v470 = vadd.f32 0.0, %v469
      %v471 = vpop.f32.mrf.mxu0
      %v472 = vpop.f32.mrf.mxu0
      %v473 = vadd.f32 0.0, %v472
      %v474 = vpop.f32.mrf.mxu0
      %475 = vmatprep.mubr.bf16.mxu0 0
      %476 = vmatmul.mubr.bf16.gmra.mxu0 %v399
      %v477 = vpop.f32.mrf.mxu0
      %v478 = vadd.f32 0.0, %v477
      %v479 = vpop.f32.mrf.mxu0
      %v480 = vpop.f32.mrf.mxu0
      %v481 = vadd.f32 0.0, %v480
      %v482 = vpop.f32.mrf.mxu0
      %483 = vmatprep.mubr.bf16.mxu0 0
      %484 = vmatmul.mubr.bf16.gmra.mxu0 %v402
      %v485 = vpop.f32.mrf.mxu0
      %v486 = vadd.f32 0.0, %v485
      %v487 = vpop.f32.mrf.mxu0
      %v488 = vpop.f32.mrf.mxu0
      %v489 = vadd.f32 0.0, %v488
      %v490 = vpop.f32.mrf.mxu0
      %491 = vmatprep.mubr.bf16.mxu0 0
      %492 = vmatmul.mubr.bf16.gmra.mxu0 %v405
      %v493 = vpop.f32.mrf.mxu0
      %v494 = vadd.f32 0.0, %v493
      %v495 = vpop.f32.mrf.mxu0
      %v496 = vpop.f32.mrf.mxu0
      %v497 = vadd.f32 0.0, %v496
      %v498 = vpop.f32.mrf.mxu0
      %499 = vdwg.mxu0
      %v501 = vunpack.c.l.b16 %v289
      %v502 = vpack.c.b16 %v501, %v320
      %v503 = vsel %vm385, %v322, 0
      %v505 = vsel %vm385, %v323, 0
      %v507 = vsel %vm385, %v324, 0
      %v509 = vsel %vm385, %v325, 0
      %v511 = vsel %vm385, %v326, 0
      %v513 = vsel %vm385, %v327, 0
      %v516 = vsel %vm385, %v502, 0
      %v519 = vsel %vm407, %v290, 0
      %521 = vmatprep.subr.bf16.mxu0 0
      %522 = vmatpush1.bf16.msra.mxu0 0
      %523 = vmatprep.subr.bf16.mxu0 0
      %524 = vmatpush1.bf16.msra.mxu0 0
      %525 = vmatprep.subr.bf16.mxu0 0
      %526 = vmatpush1.bf16.msra.mxu0 0
      %527 = vmatprep.subr.bf16.mxu0 0
      %528 = vmatpush1.bf16.msra.mxu0 0
      %529 = vmatprep.subr.bf16.mxu0 0
      %530 = vmatpush1.bf16.msra.mxu0 0
      %531 = vmatprep.subr.bf16.mxu0 0
      %532 = vmatpush1.bf16.msra.mxu0 0
      %533 = vmatprep.subr.bf16.mxu0 0
      %534 = vmatpush1.bf16.msra.mxu0 0
      %535 = vmatprep.subr.bf16.mxu0 0
      %536 = vmatpush1.bf16.msra.mxu0 %v519
      %537 = vmatprep.subr.bf16.mxu0 0
      %538 = vmatpush2.bf16.msra.mxu0 0
      %539 = vmatprep.subr.bf16.mxu0 0
      %540 = vmatpush2.bf16.msra.mxu0 0
      %541 = vmatprep.subr.bf16.mxu0 0
      %542 = vmatpush2.bf16.msra.mxu0 0
      %543 = vmatprep.subr.bf16.mxu0 0
      %544 = vmatpush2.bf16.msra.mxu0 0
      %545 = vmatprep.subr.bf16.mxu0 0
      %546 = vmatpush2.bf16.msra.mxu0 0
      %547 = vmatprep.subr.bf16.mxu0 0
      %548 = vmatpush2.bf16.msra.mxu0 0
      %549 = vmatprep.subr.bf16.mxu0 0
      %550 = vmatpush2.bf16.msra.mxu0 0
      %551 = vmatprep.subr.bf16.mxu0 0
      %552 = vmatpush2.bf16.msra.mxu0 0
      %553 = vmatprep.mubr.bf16.mxu0 0
      %554 = vmatmul.mubr.bf16.gmra.mxu0 %v503
      %v555 = vpop.f32.mrf.mxu0
      %v556 = vadd.f32 %v446, %v555
      %v557 = vpop.f32.mrf.mxu0
      %v558 = vpop.f32.mrf.mxu0
      %v559 = vadd.f32 %v449, %v558
      %v560 = vpop.f32.mrf.mxu0
      %561 = vmatprep.mubr.bf16.mxu0 0
      %562 = vmatmul.mubr.bf16.gmra.mxu0 %v505
      %v563 = vpop.f32.mrf.mxu0
      %v564 = vadd.f32 %v454, %v563
      %v565 = vpop.f32.mrf.mxu0
      %v566 = vpop.f32.mrf.mxu0
      %v567 = vadd.f32 %v457, %v566
      %v568 = vpop.f32.mrf.mxu0
      %569 = vmatprep.mubr.bf16.mxu0 0
      %570 = vmatmul.mubr.bf16.gmra.mxu0 %v507
      %v571 = vpop.f32.mrf.mxu0
      %v572 = vadd.f32 %v462, %v571
      %v573 = vpop.f32.mrf.mxu0
      %v574 = vpop.f32.mrf.mxu0
      %v575 = vadd.f32 %v465, %v574
      %v576 = vpop.f32.mrf.mxu0
      %577 = vmatprep.mubr.bf16.mxu0 0
      %578 = vmatmul.mubr.bf16.gmra.mxu0 %v509
      %v579 = vpop.f32.mrf.mxu0
      %v580 = vadd.f32 %v470, %v579
      %v581 = vpop.f32.mrf.mxu0
      %v582 = vpop.f32.mrf.mxu0
      %v583 = vadd.f32 %v473, %v582
      %v584 = vpop.f32.mrf.mxu0
      %585 = vmatprep.mubr.bf16.mxu0 0
      %586 = vmatmul.mubr.bf16.gmra.mxu0 %v511
      %v587 = vpop.f32.mrf.mxu0
      %v588 = vadd.f32 %v478, %v587
      %v589 = vpop.f32.mrf.mxu0
      %v590 = vpop.f32.mrf.mxu0
      %v591 = vadd.f32 %v481, %v590
      %v592 = vpop.f32.mrf.mxu0
      %593 = vmatprep.mubr.bf16.mxu0 0
      %594 = vmatmul.mubr.bf16.gmra.mxu0 %v513
      %v595 = vpop.f32.mrf.mxu0
      %v596 = vadd.f32 %v486, %v595
      %v597 = vpop.f32.mrf.mxu0
      %v598 = vpop.f32.mrf.mxu0
      %v599 = vadd.f32 %v489, %v598
      %v600 = vpop.f32.mrf.mxu0
      %601 = vmatprep.mubr.bf16.mxu0 0
      %602 = vmatmul.mubr.bf16.gmra.mxu0 %v516
      %v603 = vpop.f32.mrf.mxu0
      %v604 = vadd.f32 %v494, %v603
      %v605 = vpop.f32.mrf.mxu0
      %v606 = vpop.f32.mrf.mxu0
      %v607 = vadd.f32 %v497, %v606
      %v608 = vpop.f32.mrf.mxu0
      %609 = vdwg.mxu0
      %v610 = vld [vmem:[%s252] sm:$0xe]
      %s611 = scalar_lea.vmem %s1, 4
      %v612 = vld [vmem:[%s611] sm:$0x3]
      %v614 = vunpack.c.l.b16 %v610
      %v615 = vpack.c.b16 %v309, %v614
      %vm616 = vcmask 1046528
      %v617 = vrot.slane %v615, 1
      %v618 = vrot.slane %v323, 1
      %v619 = vsel %vm616, %v617, %v618
      %v620 = vrot.slane %v324, 1
      %v621 = vsel %vm616, %v618, %v620
      %v622 = vrot.slane %v325, 1
      %v623 = vsel %vm616, %v620, %v622
      %v624 = vrot.slane %v326, 1
      %v625 = vsel %vm616, %v622, %v624
      %v626 = vrot.slane %v327, 1
      %v627 = vsel %vm616, %v624, %v626
      %v628 = vrot.slane %v328, 1
      %v629 = vsel %vm616, %v626, %v628
      %v631 = vsel %vm385, %v619, 0
      %v634 = vsel %vm385, %v621, 0
      %v637 = vsel %vm385, %v623, 0
      %v640 = vsel %vm385, %v625, 0
      %v643 = vsel %vm385, %v627, 0
      %v646 = vsel %vm385, %v629, 0
      %v649 = vsel %vm385, %v628, 0
      %v652 = vsel %vm407, %v612, 0
      %654 = vmatprep.subr.bf16.mxu0 0
      %655 = vmatpush1.bf16.msra.mxu0 0
      %656 = vmatprep.subr.bf16.mxu0 0
      %657 = vmatpush1.bf16.msra.mxu0 0
      %658 = vmatprep.subr.bf16.mxu0 0
      %659 = vmatpush1.bf16.msra.mxu0 0
      %660 = vmatprep.subr.bf16.mxu0 0
      %661 = vmatpush1.bf16.msra.mxu0 0
      %662 = vmatprep.subr.bf16.mxu0 0
      %663 = vmatpush1.bf16.msra.mxu0 0
      %664 = vmatprep.subr.bf16.mxu0 0
      %665 = vmatpush1.bf16.msra.mxu0 0
      %666 = vmatprep.subr.bf16.mxu0 0
      %667 = vmatpush1.bf16.msra.mxu0 0
      %668 = vmatprep.subr.bf16.mxu0 0
      %669 = vmatpush1.bf16.msra.mxu0 %v652
      %670 = vmatprep.subr.bf16.mxu0 0
      %671 = vmatpush2.bf16.msra.mxu0 0
      %672 = vmatprep.subr.bf16.mxu0 0
      %673 = vmatpush2.bf16.msra.mxu0 0
      %674 = vmatprep.subr.bf16.mxu0 0
      %675 = vmatpush2.bf16.msra.mxu0 0
      %676 = vmatprep.subr.bf16.mxu0 0
      %677 = vmatpush2.bf16.msra.mxu0 0
      %678 = vmatprep.subr.bf16.mxu0 0
      %679 = vmatpush2.bf16.msra.mxu0 0
      %680 = vmatprep.subr.bf16.mxu0 0
      %681 = vmatpush2.bf16.msra.mxu0 0
      %682 = vmatprep.subr.bf16.mxu0 0
      %683 = vmatpush2.bf16.msra.mxu0 0
      %684 = vmatprep.subr.bf16.mxu0 0
      %685 = vmatpush2.bf16.msra.mxu0 0
      %686 = vmatprep.mubr.bf16.mxu0 0
      %687 = vmatmul.mubr.bf16.gmra.mxu0 %v631
      %v688 = vpop.f32.mrf.mxu0
      %v689 = vadd.f32 0.0, %v688
      %v690 = vpop.f32.mrf.mxu0
      %v691 = vpop.f32.mrf.mxu0
      %v692 = vadd.f32 0.0, %v691
      %v693 = vpop.f32.mrf.mxu0
      %694 = vmatprep.mubr.bf16.mxu0 0
      %695 = vmatmul.mubr.bf16.gmra.mxu0 %v634
      %v696 = vpop.f32.mrf.mxu0
      %v697 = vadd.f32 0.0, %v696
      %v698 = vpop.f32.mrf.mxu0
      %v699 = vpop.f32.mrf.mxu0
      %v700 = vadd.f32 0.0, %v699
      %v701 = vpop.f32.mrf.mxu0
      %702 = vmatprep.mubr.bf16.mxu0 0
      %703 = vmatmul.mubr.bf16.gmra.mxu0 %v637
      %v704 = vpop.f32.mrf.mxu0
      %v705 = vadd.f32 0.0, %v704
      %v706 = vpop.f32.mrf.mxu0
      %v707 = vpop.f32.mrf.mxu0
      %v708 = vadd.f32 0.0, %v707
      %v709 = vpop.f32.mrf.mxu0
      %710 = vmatprep.mubr.bf16.mxu0 0
      %711 = vmatmul.mubr.bf16.gmra.mxu0 %v640
      %v712 = vpop.f32.mrf.mxu0
      %v713 = vadd.f32 0.0, %v712
      %v714 = vpop.f32.mrf.mxu0
      %v715 = vpop.f32.mrf.mxu0
      %v716 = vadd.f32 0.0, %v715
      %v717 = vpop.f32.mrf.mxu0
      %718 = vmatprep.mubr.bf16.mxu0 0
      %719 = vmatmul.mubr.bf16.gmra.mxu0 %v643
      %v720 = vpop.f32.mrf.mxu0
      %v721 = vadd.f32 0.0, %v720
      %v722 = vpop.f32.mrf.mxu0
      %v723 = vpop.f32.mrf.mxu0
      %v724 = vadd.f32 0.0, %v723
      %v725 = vpop.f32.mrf.mxu0
      %726 = vmatprep.mubr.bf16.mxu0 0
      %727 = vmatmul.mubr.bf16.gmra.mxu0 %v646
      %v728 = vpop.f32.mrf.mxu0
      %v729 = vadd.f32 0.0, %v728
      %v730 = vpop.f32.mrf.mxu0
      %v731 = vpop.f32.mrf.mxu0
      %v732 = vadd.f32 0.0, %v731
      %v733 = vpop.f32.mrf.mxu0
      %734 = vmatprep.mubr.bf16.mxu0 0
      %735 = vmatmul.mubr.bf16.gmra.mxu0 %v649
      %v736 = vpop.f32.mrf.mxu0
      %v737 = vadd.f32 0.0, %v736
      %v738 = vpop.f32.mrf.mxu0
      %v739 = vpop.f32.mrf.mxu0
      %v740 = vadd.f32 0.0, %v739
      %v741 = vpop.f32.mrf.mxu0
      %742 = vdwg.mxu0
      %v743 = vadd.f32 %v556, %v689
      %v744 = vadd.f32 %v559, %v692
      %v745 = vadd.f32 %v564, %v697
      %v746 = vadd.f32 %v567, %v700
      %v747 = vadd.f32 %v572, %v705
      %v748 = vadd.f32 %v575, %v708
      %v749 = vadd.f32 %v580, %v713
      %v750 = vadd.f32 %v583, %v716
      %v751 = vadd.f32 %v588, %v721
      %v752 = vadd.f32 %v591, %v724
      %v753 = vadd.f32 %v596, %v729
      %v754 = vadd.f32 %v599, %v732
      %v755 = vadd.f32 %v604, %v737
      %v756 = vadd.f32 %v607, %v740
      %v757 = vld [vmem:[%s252 + $0x8] sm:$0xe]
      %v758 = vld [vmem:[%s252 + $0xc] sm:$0xf]
      %v759 = vld [vmem:[%s252 + $0x10] sm:$0xf]
      %v760 = vld [vmem:[%s252 + $0x14] sm:$0xf]
      %v761 = vld [vmem:[%s252 + $0x18] sm:$0xf]
      %v762 = vld [vmem:[%s252 + $0x1c] sm:$0xf]
      %v763 = vld [vmem:[%s252 + $0x20] sm:$0xf]
      %v764 = vld [vmem:[%s252 + $0x24] sm:$0xf]
      %v765 = vld [vmem:[%s252 + $0x28] sm:$0xf]
      %v766 = vld [vmem:[%s252 + $0x2c] sm:$0xf]
      %v767 = vld [vmem:[%s252 + $0x30] sm:$0xf]
      %v768 = vld [vmem:[%s252 + $0x34] sm:$0xf]
      %v769 = vld [vmem:[%s252 + $0x38] sm:$0xf]
      %v770 = vld [vmem:[%s252 + $0x3c] sm:$0x7]
      %s771 = scalar_lea.vmem %s1, 6
      %v772 = vld [vmem:[%s771] sm:$0x3]
      %v787 = vunpack.c.l.b16 %v757
      %v788 = vunpack.c.l.b16 %v758
      %v789 = vunpack.c.l.b16 %v759
      %v790 = vunpack.c.l.b16 %v760
      %v791 = vunpack.c.l.b16 %v761
      %v792 = vunpack.c.l.b16 %v762
      %v793 = vunpack.c.l.b16 %v763
      %v794 = vunpack.c.l.b16 %v764
      %v795 = vunpack.c.l.b16 %v765
      %v796 = vunpack.c.l.b16 %v766
      %v797 = vunpack.c.l.b16 %v767
      %v798 = vunpack.c.l.b16 %v768
      %v799 = vunpack.c.l.b16 %v769
      %v800 = vunpack.c.l.b16 %v770
      %v801 = vpack.c.b16 %v788, %v787
      %v802 = vpack.c.b16 %v790, %v789
      %v803 = vpack.c.b16 %v792, %v791
      %v804 = vpack.c.b16 %v794, %v793
      %v805 = vpack.c.b16 %v796, %v795
      %v806 = vpack.c.b16 %v798, %v797
      %v807 = vpack.c.b16 %v800, %v799
      %v808 = vrot.slane %v801, 1
      %v809 = vrot.slane %v802, 1
      %v810 = vsel %vm616, %v808, %v809
      %v811 = vrot.slane %v803, 1
      %v812 = vsel %vm616, %v809, %v811
      %v813 = vrot.slane %v804, 1
      %v814 = vsel %vm616, %v811, %v813
      %v815 = vrot.slane %v805, 1
      %v816 = vsel %vm616, %v813, %v815
      %v817 = vrot.slane %v806, 1
      %v818 = vsel %vm616, %v815, %v817
      %v819 = vrot.slane %v807, 1
      %v820 = vsel %vm616, %v817, %v819
      %v822 = vsel %vm385, %v810, 0
      %v825 = vsel %vm385, %v812, 0
      %v828 = vsel %vm385, %v814, 0
      %v831 = vsel %vm385, %v816, 0
      %v834 = vsel %vm385, %v818, 0
      %v837 = vsel %vm385, %v820, 0
      %v840 = vsel %vm385, %v819, 0
      %v843 = vsel %vm407, %v772, 0
      %845 = vmatprep.subr.bf16.mxu0 0
      %846 = vmatpush1.bf16.msra.mxu0 0
      %847 = vmatprep.subr.bf16.mxu0 0
      %848 = vmatpush1.bf16.msra.mxu0 0
      %849 = vmatprep.subr.bf16.mxu0 0
      %850 = vmatpush1.bf16.msra.mxu0 0
      %851 = vmatprep.subr.bf16.mxu0 0
      %852 = vmatpush1.bf16.msra.mxu0 0
      %853 = vmatprep.subr.bf16.mxu0 0
      %854 = vmatpush1.bf16.msra.mxu0 0
      %855 = vmatprep.subr.bf16.mxu0 0
      %856 = vmatpush1.bf16.msra.mxu0 0
      %857 = vmatprep.subr.bf16.mxu0 0
      %858 = vmatpush1.bf16.msra.mxu0 0
      %859 = vmatprep.subr.bf16.mxu0 0
      %860 = vmatpush1.bf16.msra.mxu0 %v843
      %861 = vmatprep.subr.bf16.mxu0 0
      %862 = vmatpush2.bf16.msra.mxu0 0
      %863 = vmatprep.subr.bf16.mxu0 0
      %864 = vmatpush2.bf16.msra.mxu0 0
      %865 = vmatprep.subr.bf16.mxu0 0
      %866 = vmatpush2.bf16.msra.mxu0 0
      %867 = vmatprep.subr.bf16.mxu0 0
      %868 = vmatpush2.bf16.msra.mxu0 0
      %869 = vmatprep.subr.bf16.mxu0 0
      %870 = vmatpush2.bf16.msra.mxu0 0
      %871 = vmatprep.subr.bf16.mxu0 0
      %872 = vmatpush2.bf16.msra.mxu0 0
      %873 = vmatprep.subr.bf16.mxu0 0
      %874 = vmatpush2.bf16.msra.mxu0 0
      %875 = vmatprep.subr.bf16.mxu0 0
      %876 = vmatpush2.bf16.msra.mxu0 0
      %877 = vmatprep.mubr.bf16.mxu0 0
      %878 = vmatmul.mubr.bf16.gmra.mxu0 %v822
      %v879 = vpop.f32.mrf.mxu0
      %v880 = vadd.f32 0.0, %v879
      %v881 = vpop.f32.mrf.mxu0
      %v882 = vpop.f32.mrf.mxu0
      %v883 = vadd.f32 0.0, %v882
      %v884 = vpop.f32.mrf.mxu0
      %885 = vmatprep.mubr.bf16.mxu0 0
      %886 = vmatmul.mubr.bf16.gmra.mxu0 %v825
      %v887 = vpop.f32.mrf.mxu0
      %v888 = vadd.f32 0.0, %v887
      %v889 = vpop.f32.mrf.mxu0
      %v890 = vpop.f32.mrf.mxu0
      %v891 = vadd.f32 0.0, %v890
      %v892 = vpop.f32.mrf.mxu0
      %893 = vmatprep.mubr.bf16.mxu0 0
      %894 = vmatmul.mubr.bf16.gmra.mxu0 %v828
      %v895 = vpop.f32.mrf.mxu0
      %v896 = vadd.f32 0.0, %v895
      %v897 = vpop.f32.mrf.mxu0
      %v898 = vpop.f32.mrf.mxu0
      %v899 = vadd.f32 0.0, %v898
      %v900 = vpop.f32.mrf.mxu0
      %901 = vmatprep.mubr.bf16.mxu0 0
      %902 = vmatmul.mubr.bf16.gmra.mxu0 %v831
      %v903 = vpop.f32.mrf.mxu0
      %v904 = vadd.f32 0.0, %v903
      %v905 = vpop.f32.mrf.mxu0
      %v906 = vpop.f32.mrf.mxu0
      %v907 = vadd.f32 0.0, %v906
      %v908 = vpop.f32.mrf.mxu0
      %909 = vmatprep.mubr.bf16.mxu0 0
      %910 = vmatmul.mubr.bf16.gmra.mxu0 %v834
      %v911 = vpop.f32.mrf.mxu0
      %v912 = vadd.f32 0.0, %v911
      %v913 = vpop.f32.mrf.mxu0
      %v914 = vpop.f32.mrf.mxu0
      %v915 = vadd.f32 0.0, %v914
      %v916 = vpop.f32.mrf.mxu0
      %917 = vmatprep.mubr.bf16.mxu0 0
      %918 = vmatmul.mubr.bf16.gmra.mxu0 %v837
      %v919 = vpop.f32.mrf.mxu0
      %v920 = vadd.f32 0.0, %v919
      %v921 = vpop.f32.mrf.mxu0
      %v922 = vpop.f32.mrf.mxu0
      %v923 = vadd.f32 0.0, %v922
      %v924 = vpop.f32.mrf.mxu0
      %925 = vmatprep.mubr.bf16.mxu0 0
      %926 = vmatmul.mubr.bf16.gmra.mxu0 %v840
      %v927 = vpop.f32.mrf.mxu0
      %v928 = vadd.f32 0.0, %v927
      %v929 = vpop.f32.mrf.mxu0
      %v930 = vpop.f32.mrf.mxu0
      %v931 = vadd.f32 0.0, %v930
      %v932 = vpop.f32.mrf.mxu0
      %933 = vdwg.mxu0
      %v934 = vadd.f32 %v743, %v880
      %v935 = vadd.f32 %v744, %v883
      %v936 = vadd.f32 %v745, %v888
      %v937 = vadd.f32 %v746, %v891
      %v938 = vadd.f32 %v747, %v896
      %v939 = vadd.f32 %v748, %v899
      %v940 = vadd.f32 %v749, %v904
      %v941 = vadd.f32 %v750, %v907
      %v942 = vadd.f32 %v751, %v912
      %v943 = vadd.f32 %v752, %v915
      %v944 = vadd.f32 %v753, %v920
      %v945 = vadd.f32 %v754, %v923
      %v946 = vadd.f32 %v755, %v928
      %v947 = vadd.f32 %v756, %v931
      %v948 = vld [vmem:[%s252 + $0x3c] sm:$0xf]
      %s949 = scalar_lea.vmem %s1, 8
      %v950 = vld [vmem:[%s949] sm:$0x3]
      %v952 = vunpack.c.l.b16 %v948
      %v953 = vpack.c.b16 %v952, %v799
      %vm954 = vsmask.f32 6400
      %v956 = vshrl.u32 %v801, 16
      %v958 = vrot.slane %v956, 1
      %v959 = vshll.u32 %v801, 16
      %v961 = vrot.slane %v959, 2
      %v962 = vor.u32 %v958, %v961
      %v964 = vshrl.u32 %v802, 16
      %v966 = vrot.slane %v964, 1
      %v967 = vshll.u32 %v802, 16
      %v969 = vrot.slane %v967, 2
      %v970 = vor.u32 %v966, %v969
      %v971 = vsel %vm954, %v962, %v970
      %v973 = vshrl.u32 %v803, 16
      %v975 = vrot.slane %v973, 1
      %v976 = vshll.u32 %v803, 16
      %v978 = vrot.slane %v976, 2
      %v979 = vor.u32 %v975, %v978
      %v980 = vsel %vm954, %v970, %v979
      %v982 = vshrl.u32 %v804, 16
      %v984 = vrot.slane %v982, 1
      %v985 = vshll.u32 %v804, 16
      %v987 = vrot.slane %v985, 2
      %v988 = vor.u32 %v984, %v987
      %v989 = vsel %vm954, %v979, %v988
      %v991 = vshrl.u32 %v805, 16
      %v993 = vrot.slane %v991, 1
      %v994 = vshll.u32 %v805, 16
      %v996 = vrot.slane %v994, 2
      %v997 = vor.u32 %v993, %v996
      %v998 = vsel %vm954, %v988, %v997
      %v1000 = vshrl.u32 %v806, 16
      %v1002 = vrot.slane %v1000, 1
      %v1003 = vshll.u32 %v806, 16
      %v1005 = vrot.slane %v1003, 2
      %v1006 = vor.u32 %v1002, %v1005
      %v1007 = vsel %vm954, %v997, %v1006
      %v1009 = vshrl.u32 %v953, 16
      %v1011 = vrot.slane %v1009, 1
      %v1012 = vshll.u32 %v953, 16
      %v1014 = vrot.slane %v1012, 2
      %v1015 = vor.u32 %v1011, %v1014
      %v1016 = vsel %vm954, %v1006, %v1015
      %v1018 = vsel %vm385, %v971, 0
      %v1021 = vsel %vm385, %v980, 0
      %v1024 = vsel %vm385, %v989, 0
      %v1027 = vsel %vm385, %v998, 0
      %v1030 = vsel %vm385, %v1007, 0
      %v1033 = vsel %vm385, %v1016, 0
      %v1036 = vsel %vm385, %v1015, 0
      %v1039 = vsel %vm407, %v950, 0
      %1041 = vmatprep.subr.bf16.mxu0 0
      %1042 = vmatpush1.bf16.msra.mxu0 0
      %1043 = vmatprep.subr.bf16.mxu0 0
      %1044 = vmatpush1.bf16.msra.mxu0 0
      %1045 = vmatprep.subr.bf16.mxu0 0
      %1046 = vmatpush1.bf16.msra.mxu0 0
      %1047 = vmatprep.subr.bf16.mxu0 0
      %1048 = vmatpush1.bf16.msra.mxu0 0
      %1049 = vmatprep.subr.bf16.mxu0 0
      %1050 = vmatpush1.bf16.msra.mxu0 0
      %1051 = vmatprep.subr.bf16.mxu0 0
      %1052 = vmatpush1.bf16.msra.mxu0 0
      %1053 = vmatprep.subr.bf16.mxu0 0
      %1054 = vmatpush1.bf16.msra.mxu0 0
      %1055 = vmatprep.subr.bf16.mxu0 0
      %1056 = vmatpush1.bf16.msra.mxu0 %v1039
      %1057 = vmatprep.subr.bf16.mxu0 0
      %1058 = vmatpush2.bf16.msra.mxu0 0
      %1059 = vmatprep.subr.bf16.mxu0 0
      %1060 = vmatpush2.bf16.msra.mxu0 0
      %1061 = vmatprep.subr.bf16.mxu0 0
      %1062 = vmatpush2.bf16.msra.mxu0 0
      %1063 = vmatprep.subr.bf16.mxu0 0
      %1064 = vmatpush2.bf16.msra.mxu0 0
      %1065 = vmatprep.subr.bf16.mxu0 0
      %1066 = vmatpush2.bf16.msra.mxu0 0
      %1067 = vmatprep.subr.bf16.mxu0 0
      %1068 = vmatpush2.bf16.msra.mxu0 0
      %1069 = vmatprep.subr.bf16.mxu0 0
      %1070 = vmatpush2.bf16.msra.mxu0 0
      %1071 = vmatprep.subr.bf16.mxu0 0
      %1072 = vmatpush2.bf16.msra.mxu0 0
      %1073 = vmatprep.mubr.bf16.mxu0 0
      %1074 = vmatmul.mubr.bf16.gmra.mxu0 %v1018
      %v1075 = vpop.f32.mrf.mxu0
      %v1076 = vadd.f32 0.0, %v1075
      %v1077 = vpop.f32.mrf.mxu0
      %v1078 = vpop.f32.mrf.mxu0
      %v1079 = vadd.f32 0.0, %v1078
      %v1080 = vpop.f32.mrf.mxu0
      %1081 = vmatprep.mubr.bf16.mxu0 0
      %1082 = vmatmul.mubr.bf16.gmra.mxu0 %v1021
      %v1083 = vpop.f32.mrf.mxu0
      %v1084 = vadd.f32 0.0, %v1083
      %v1085 = vpop.f32.mrf.mxu0
      %v1086 = vpop.f32.mrf.mxu0
      %v1087 = vadd.f32 0.0, %v1086
      %v1088 = vpop.f32.mrf.mxu0
      %1089 = vmatprep.mubr.bf16.mxu0 0
      %1090 = vmatmul.mubr.bf16.gmra.mxu0 %v1024
      %v1091 = vpop.f32.mrf.mxu0
      %v1092 = vadd.f32 0.0, %v1091
      %v1093 = vpop.f32.mrf.mxu0
      %v1094 = vpop.f32.mrf.mxu0
      %v1095 = vadd.f32 0.0, %v1094
      %v1096 = vpop.f32.mrf.mxu0
      %1097 = vmatprep.mubr.bf16.mxu0 0
      %1098 = vmatmul.mubr.bf16.gmra.mxu0 %v1027
      %v1099 = vpop.f32.mrf.mxu0
      %v1100 = vadd.f32 0.0, %v1099
      %v1101 = vpop.f32.mrf.mxu0
      %v1102 = vpop.f32.mrf.mxu0
      %v1103 = vadd.f32 0.0, %v1102
      %v1104 = vpop.f32.mrf.mxu0
      %1105 = vmatprep.mubr.bf16.mxu0 0
      %1106 = vmatmul.mubr.bf16.gmra.mxu0 %v1030
      %v1107 = vpop.f32.mrf.mxu0
      %v1108 = vadd.f32 0.0, %v1107
      %v1109 = vpop.f32.mrf.mxu0
      %v1110 = vpop.f32.mrf.mxu0
      %v1111 = vadd.f32 0.0, %v1110
      %v1112 = vpop.f32.mrf.mxu0
      %1113 = vmatprep.mubr.bf16.mxu0 0
      %1114 = vmatmul.mubr.bf16.gmra.mxu0 %v1033
      %v1115 = vpop.f32.mrf.mxu0
      %v1116 = vadd.f32 0.0, %v1115
      %v1117 = vpop.f32.mrf.mxu0
      %v1118 = vpop.f32.mrf.mxu0
      %v1119 = vadd.f32 0.0, %v1118
      %v1120 = vpop.f32.mrf.mxu0
      %1121 = vmatprep.mubr.bf16.mxu0 0
      %1122 = vmatmul.mubr.bf16.gmra.mxu0 %v1036
      %v1123 = vpop.f32.mrf.mxu0
      %v1124 = vadd.f32 0.0, %v1123
      %v1125 = vpop.f32.mrf.mxu0
      %v1126 = vpop.f32.mrf.mxu0
      %v1127 = vadd.f32 0.0, %v1126
      %v1128 = vpop.f32.mrf.mxu0
      %1129 = vdwg.mxu0
      %v1130 = vadd.f32 %v934, %v1076
      %v1131 = vadd.f32 %v935, %v1079
      %v1132 = vadd.f32 %v936, %v1084
      %v1133 = vadd.f32 %v937, %v1087
      %v1134 = vadd.f32 %v938, %v1092
      %v1135 = vadd.f32 %v939, %v1095
      %v1136 = vadd.f32 %v940, %v1100
      %v1137 = vadd.f32 %v941, %v1103
      %v1138 = vadd.f32 %v942, %v1108
      %v1139 = vadd.f32 %v943, %v1111
      %v1140 = vadd.f32 %v944, %v1116
      %v1141 = vadd.f32 %v945, %v1119
      %v1142 = vadd.f32 %v946, %v1124
      %v1143 = vadd.f32 %v947, %v1127
      %v1144 = vld [vmem:[%s252 + $0x8] sm:$0xc]
      %s1145 = scalar_lea.vmem %s1, 10
      %v1146 = vld [vmem:[%s1145] sm:$0x3]
      %v1148 = vunpack.c.l.b16 %v1144
      %v1149 = vpack.c.b16 %v788, %v1148
      %vm1150 = vcmask 1045504
      %v1151 = vrot.slane %v1149, 2
      %v1152 = vrot.slane %v802, 2
      %v1153 = vsel %vm1150, %v1151, %v1152
      %v1154 = vrot.slane %v803, 2
      %v1155 = vsel %vm1150, %v1152, %v1154
      %v1156 = vrot.slane %v804, 2
      %v1157 = vsel %vm1150, %v1154, %v1156
      %v1158 = vrot.slane %v805, 2
      %v1159 = vsel %vm1150, %v1156, %v1158
      %v1160 = vrot.slane %v806, 2
      %v1161 = vsel %vm1150, %v1158, %v1160
      %v1162 = vrot.slane %v953, 2
      %v1163 = vsel %vm1150, %v1160, %v1162
      %v1165 = vsel %vm385, %v1153, 0
      %v1168 = vsel %vm385, %v1155, 0
      %v1171 = vsel %vm385, %v1157, 0
      %v1174 = vsel %vm385, %v1159, 0
      %v1177 = vsel %vm385, %v1161, 0
      %v1180 = vsel %vm385, %v1163, 0
      %v1183 = vsel %vm385, %v1162, 0
      %v1186 = vsel %vm407, %v1146, 0
      %1188 = vmatprep.subr.bf16.mxu0 0
      %1189 = vmatpush1.bf16.msra.mxu0 0
      %1190 = vmatprep.subr.bf16.mxu0 0
      %1191 = vmatpush1.bf16.msra.mxu0 0
      %1192 = vmatprep.subr.bf16.mxu0 0
      %1193 = vmatpush1.bf16.msra.mxu0 0
      %1194 = vmatprep.subr.bf16.mxu0 0
      %1195 = vmatpush1.bf16.msra.mxu0 0
      %1196 = vmatprep.subr.bf16.mxu0 0
      %1197 = vmatpush1.bf16.msra.mxu0 0
      %1198 = vmatprep.subr.bf16.mxu0 0
      %1199 = vmatpush1.bf16.msra.mxu0 0
      %1200 = vmatprep.subr.bf16.mxu0 0
      %1201 = vmatpush1.bf16.msra.mxu0 0
      %1202 = vmatprep.subr.bf16.mxu0 0
      %1203 = vmatpush1.bf16.msra.mxu0 %v1186
      %1204 = vmatprep.subr.bf16.mxu0 0
      %1205 = vmatpush2.bf16.msra.mxu0 0
      %1206 = vmatprep.subr.bf16.mxu0 0
      %1207 = vmatpush2.bf16.msra.mxu0 0
      %1208 = vmatprep.subr.bf16.mxu0 0
      %1209 = vmatpush2.bf16.msra.mxu0 0
      %1210 = vmatprep.subr.bf16.mxu0 0
      %1211 = vmatpush2.bf16.msra.mxu0 0
      %1212 = vmatprep.subr.bf16.mxu0 0
      %1213 = vmatpush2.bf16.msra.mxu0 0
      %1214 = vmatprep.subr.bf16.mxu0 0
      %1215 = vmatpush2.bf16.msra.mxu0 0
      %1216 = vmatprep.subr.bf16.mxu0 0
      %1217 = vmatpush2.bf16.msra.mxu0 0
      %1218 = vmatprep.subr.bf16.mxu0 0
      %1219 = vmatpush2.bf16.msra.mxu0 0
      %1220 = vmatprep.mubr.bf16.mxu0 0
      %1221 = vmatmul.mubr.bf16.gmra.mxu0 %v1165
      %v1222 = vpop.f32.mrf.mxu0
      %v1223 = vadd.f32 0.0, %v1222
      %v1224 = vpop.f32.mrf.mxu0
      %v1225 = vpop.f32.mrf.mxu0
      %v1226 = vadd.f32 0.0, %v1225
      %v1227 = vpop.f32.mrf.mxu0
      %1228 = vmatprep.mubr.bf16.mxu0 0
      %1229 = vmatmul.mubr.bf16.gmra.mxu0 %v1168
      %v1230 = vpop.f32.mrf.mxu0
      %v1231 = vadd.f32 0.0, %v1230
      %v1232 = vpop.f32.mrf.mxu0
      %v1233 = vpop.f32.mrf.mxu0
      %v1234 = vadd.f32 0.0, %v1233
      %v1235 = vpop.f32.mrf.mxu0
      %1236 = vmatprep.mubr.bf16.mxu0 0
      %1237 = vmatmul.mubr.bf16.gmra.mxu0 %v1171
      %v1238 = vpop.f32.mrf.mxu0
      %v1239 = vadd.f32 0.0, %v1238
      %v1240 = vpop.f32.mrf.mxu0
      %v1241 = vpop.f32.mrf.mxu0
      %v1242 = vadd.f32 0.0, %v1241
      %v1243 = vpop.f32.mrf.mxu0
      %1244 = vmatprep.mubr.bf16.mxu0 0
      %1245 = vmatmul.mubr.bf16.gmra.mxu0 %v1174
      %v1246 = vpop.f32.mrf.mxu0
      %v1247 = vadd.f32 0.0, %v1246
      %v1248 = vpop.f32.mrf.mxu0
      %v1249 = vpop.f32.mrf.mxu0
      %v1250 = vadd.f32 0.0, %v1249
      %v1251 = vpop.f32.mrf.mxu0
      %1252 = vmatprep.mubr.bf16.mxu0 0
      %1253 = vmatmul.mubr.bf16.gmra.mxu0 %v1177
      %v1254 = vpop.f32.mrf.mxu0
      %v1255 = vadd.f32 0.0, %v1254
      %v1256 = vpop.f32.mrf.mxu0
      %v1257 = vpop.f32.mrf.mxu0
      %v1258 = vadd.f32 0.0, %v1257
      %v1259 = vpop.f32.mrf.mxu0
      %1260 = vmatprep.mubr.bf16.mxu0 0
      %1261 = vmatmul.mubr.bf16.gmra.mxu0 %v1180
      %v1262 = vpop.f32.mrf.mxu0
      %v1263 = vadd.f32 0.0, %v1262
      %v1264 = vpop.f32.mrf.mxu0
      %v1265 = vpop.f32.mrf.mxu0
      %v1266 = vadd.f32 0.0, %v1265
      %v1267 = vpop.f32.mrf.mxu0
      %1268 = vmatprep.mubr.bf16.mxu0 0
      %1269 = vmatmul.mubr.bf16.gmra.mxu0 %v1183
      %v1270 = vpop.f32.mrf.mxu0
      %v1271 = vadd.f32 0.0, %v1270
      %v1272 = vpop.f32.mrf.mxu0
      %v1273 = vpop.f32.mrf.mxu0
      %v1274 = vadd.f32 0.0, %v1273
      %v1275 = vpop.f32.mrf.mxu0
      %1276 = vdwg.mxu0
      %v1277 = vadd.f32 %v1130, %v1223
      %v1278 = vadd.f32 %v1131, %v1226
      %v1279 = vadd.f32 %v1132, %v1231
      %v1280 = vadd.f32 %v1133, %v1234
      %v1281 = vadd.f32 %v1134, %v1239
      %v1282 = vadd.f32 %v1135, %v1242
      %v1283 = vadd.f32 %v1136, %v1247
      %v1284 = vadd.f32 %v1137, %v1250
      %v1285 = vadd.f32 %v1138, %v1255
      %v1286 = vadd.f32 %v1139, %v1258
      %v1287 = vadd.f32 %v1140, %v1263
      %v1288 = vadd.f32 %v1141, %v1266
      %v1289 = vadd.f32 %v1142, %v1271
      %v1290 = vadd.f32 %v1143, %v1274
      %v1291 = vld [vmem:[%s252 + $0x10] sm:$0xc]
      %v1292 = vld [vmem:[%s252 + $0x14] sm:$0xf]
      %v1293 = vld [vmem:[%s252 + $0x18] sm:$0xf]
      %v1294 = vld [vmem:[%s252 + $0x1c] sm:$0xf]
      %v1295 = vld [vmem:[%s252 + $0x20] sm:$0xf]
      %v1296 = vld [vmem:[%s252 + $0x24] sm:$0xf]
      %v1297 = vld [vmem:[%s252 + $0x28] sm:$0xf]
      %v1298 = vld [vmem:[%s252 + $0x2c] sm:$0xf]
      %v1299 = vld [vmem:[%s252 + $0x30] sm:$0xf]
      %v1300 = vld [vmem:[%s252 + $0x34] sm:$0xf]
      %v1301 = vld [vmem:[%s252 + $0x38] sm:$0xf]
      %v1302 = vld [vmem:[%s252 + $0x3c] sm:$0xf]
      %v1303 = vld [vmem:[%s252 + $0x40] sm:$0xf]
      %v1304 = vld [vmem:[%s252 + $0x44] sm:$0xf]
      %s1305 = scalar_lea.vmem %s1, 12
      %v1306 = vld [vmem:[%s1305] sm:$0x3]
      %v1321 = vunpack.c.l.b16 %v1291
      %v1322 = vunpack.c.l.b16 %v1292
      %v1323 = vunpack.c.l.b16 %v1293
      %v1324 = vunpack.c.l.b16 %v1294
      %v1325 = vunpack.c.l.b16 %v1295
      %v1326 = vunpack.c.l.b16 %v1296
      %v1327 = vunpack.c.l.b16 %v1297
      %v1328 = vunpack.c.l.b16 %v1298
      %v1329 = vunpack.c.l.b16 %v1299
      %v1330 = vunpack.c.l.b16 %v1300
      %v1331 = vunpack.c.l.b16 %v1301
      %v1332 = vunpack.c.l.b16 %v1302
      %v1333 = vunpack.c.l.b16 %v1303
      %v1334 = vunpack.c.l.b16 %v1304
      %v1335 = vpack.c.b16 %v1322, %v1321
      %v1336 = vpack.c.b16 %v1324, %v1323
      %v1337 = vpack.c.b16 %v1326, %v1325
      %v1338 = vpack.c.b16 %v1328, %v1327
      %v1339 = vpack.c.b16 %v1330, %v1329
      %v1340 = vpack.c.b16 %v1332, %v1331
      %v1341 = vpack.c.b16 %v1334, %v1333
      %v1342 = vrot.slane %v1335, 2
      %v1343 = vrot.slane %v1336, 2
      %v1344 = vsel %vm1150, %v1342, %v1343
      %v1345 = vrot.slane %v1337, 2
      %v1346 = vsel %vm1150, %v1343, %v1345
      %v1347 = vrot.slane %v1338, 2
      %v1348 = vsel %vm1150, %v1345, %v1347
      %v1349 = vrot.slane %v1339, 2
      %v1350 = vsel %vm1150, %v1347, %v1349
      %v1351 = vrot.slane %v1340, 2
      %v1352 = vsel %vm1150, %v1349, %v1351
      %v1353 = vrot.slane %v1341, 2
      %v1354 = vsel %vm1150, %v1351, %v1353
      %v1356 = vsel %vm385, %v1344, 0
      %v1359 = vsel %vm385, %v1346, 0
      %v1362 = vsel %vm385, %v1348, 0
      %v1365 = vsel %vm385, %v1350, 0
      %v1368 = vsel %vm385, %v1352, 0
      %v1371 = vsel %vm385, %v1354, 0
      %v1374 = vsel %vm385, %v1353, 0
      %v1377 = vsel %vm407, %v1306, 0
      %1379 = vmatprep.subr.bf16.mxu0 0
      %1380 = vmatpush1.bf16.msra.mxu0 0
      %1381 = vmatprep.subr.bf16.mxu0 0
      %1382 = vmatpush1.bf16.msra.mxu0 0
      %1383 = vmatprep.subr.bf16.mxu0 0
      %1384 = vmatpush1.bf16.msra.mxu0 0
      %1385 = vmatprep.subr.bf16.mxu0 0
      %1386 = vmatpush1.bf16.msra.mxu0 0
      %1387 = vmatprep.subr.bf16.mxu0 0
      %1388 = vmatpush1.bf16.msra.mxu0 0
      %1389 = vmatprep.subr.bf16.mxu0 0
      %1390 = vmatpush1.bf16.msra.mxu0 0
      %1391 = vmatprep.subr.bf16.mxu0 0
      %1392 = vmatpush1.bf16.msra.mxu0 0
      %1393 = vmatprep.subr.bf16.mxu0 0
      %1394 = vmatpush1.bf16.msra.mxu0 %v1377
      %1395 = vmatprep.subr.bf16.mxu0 0
      %1396 = vmatpush2.bf16.msra.mxu0 0
      %1397 = vmatprep.subr.bf16.mxu0 0
      %1398 = vmatpush2.bf16.msra.mxu0 0
      %1399 = vmatprep.subr.bf16.mxu0 0
      %1400 = vmatpush2.bf16.msra.mxu0 0
      %1401 = vmatprep.subr.bf16.mxu0 0
      %1402 = vmatpush2.bf16.msra.mxu0 0
      %1403 = vmatprep.subr.bf16.mxu0 0
      %1404 = vmatpush2.bf16.msra.mxu0 0
      %1405 = vmatprep.subr.bf16.mxu0 0
      %1406 = vmatpush2.bf16.msra.mxu0 0
      %1407 = vmatprep.subr.bf16.mxu0 0
      %1408 = vmatpush2.bf16.msra.mxu0 0
      %1409 = vmatprep.subr.bf16.mxu0 0
      %1410 = vmatpush2.bf16.msra.mxu0 0
      %1411 = vmatprep.mubr.bf16.mxu0 0
      %1412 = vmatmul.mubr.bf16.gmra.mxu0 %v1356
      %v1413 = vpop.f32.mrf.mxu0
      %v1414 = vadd.f32 0.0, %v1413
      %v1415 = vpop.f32.mrf.mxu0
      %v1416 = vpop.f32.mrf.mxu0
      %v1417 = vadd.f32 0.0, %v1416
      %v1418 = vpop.f32.mrf.mxu0
      %1419 = vmatprep.mubr.bf16.mxu0 0
      %1420 = vmatmul.mubr.bf16.gmra.mxu0 %v1359
      %v1421 = vpop.f32.mrf.mxu0
      %v1422 = vadd.f32 0.0, %v1421
      %v1423 = vpop.f32.mrf.mxu0
      %v1424 = vpop.f32.mrf.mxu0
      %v1425 = vadd.f32 0.0, %v1424
      %v1426 = vpop.f32.mrf.mxu0
      %1427 = vmatprep.mubr.bf16.mxu0 0
      %1428 = vmatmul.mubr.bf16.gmra.mxu0 %v1362
      %v1429 = vpop.f32.mrf.mxu0
      %v1430 = vadd.f32 0.0, %v1429
      %v1431 = vpop.f32.mrf.mxu0
      %v1432 = vpop.f32.mrf.mxu0
      %v1433 = vadd.f32 0.0, %v1432
      %v1434 = vpop.f32.mrf.mxu0
      %1435 = vmatprep.mubr.bf16.mxu0 0
      %1436 = vmatmul.mubr.bf16.gmra.mxu0 %v1365
      %v1437 = vpop.f32.mrf.mxu0
      %v1438 = vadd.f32 0.0, %v1437
      %v1439 = vpop.f32.mrf.mxu0
      %v1440 = vpop.f32.mrf.mxu0
      %v1441 = vadd.f32 0.0, %v1440
      %v1442 = vpop.f32.mrf.mxu0
      %1443 = vmatprep.mubr.bf16.mxu0 0
      %1444 = vmatmul.mubr.bf16.gmra.mxu0 %v1368
      %v1445 = vpop.f32.mrf.mxu0
      %v1446 = vadd.f32 0.0, %v1445
      %v1447 = vpop.f32.mrf.mxu0
      %v1448 = vpop.f32.mrf.mxu0
      %v1449 = vadd.f32 0.0, %v1448
      %v1450 = vpop.f32.mrf.mxu0
      %1451 = vmatprep.mubr.bf16.mxu0 0
      %1452 = vmatmul.mubr.bf16.gmra.mxu0 %v1371
      %v1453 = vpop.f32.mrf.mxu0
      %v1454 = vadd.f32 0.0, %v1453
      %v1455 = vpop.f32.mrf.mxu0
      %v1456 = vpop.f32.mrf.mxu0
      %v1457 = vadd.f32 0.0, %v1456
      %v1458 = vpop.f32.mrf.mxu0
      %1459 = vmatprep.mubr.bf16.mxu0 0
      %1460 = vmatmul.mubr.bf16.gmra.mxu0 %v1374
      %v1461 = vpop.f32.mrf.mxu0
      %v1462 = vadd.f32 0.0, %v1461
      %v1463 = vpop.f32.mrf.mxu0
      %v1464 = vpop.f32.mrf.mxu0
      %v1465 = vadd.f32 0.0, %v1464
      %v1466 = vpop.f32.mrf.mxu0
      %1467 = vdwg.mxu0
      %v1468 = vadd.f32 %v1277, %v1414
      %v1469 = vadd.f32 %v1278, %v1417
      %v1470 = vadd.f32 %v1279, %v1422
      %v1471 = vadd.f32 %v1280, %v1425
      %v1472 = vadd.f32 %v1281, %v1430
      %v1473 = vadd.f32 %v1282, %v1433
      %v1474 = vadd.f32 %v1283, %v1438
      %v1475 = vadd.f32 %v1284, %v1441
      %v1476 = vadd.f32 %v1285, %v1446
      %v1477 = vadd.f32 %v1286, %v1449
      %v1478 = vadd.f32 %v1287, %v1454
      %v1479 = vadd.f32 %v1288, %v1457
      %v1480 = vadd.f32 %v1289, %v1462
      %v1481 = vadd.f32 %v1290, %v1465
      %v1482 = vld [vmem:[%s252 + $0x10] sm:$0xc]
      %v1483 = vld [vmem:[%s252 + $0x14] sm:$0xf]
      %v1484 = vld [vmem:[%s252 + $0x18] sm:$0xf]
      %v1485 = vld [vmem:[%s252 + $0x1c] sm:$0xf]
      %v1486 = vld [vmem:[%s252 + $0x20] sm:$0xf]
      %v1487 = vld [vmem:[%s252 + $0x24] sm:$0xf]
      %v1488 = vld [vmem:[%s252 + $0x28] sm:$0xf]
      %v1489 = vld [vmem:[%s252 + $0x2c] sm:$0xf]
      %v1490 = vld [vmem:[%s252 + $0x30] sm:$0xf]
      %v1491 = vld [vmem:[%s252 + $0x34] sm:$0xf]
      %v1492 = vld [vmem:[%s252 + $0x38] sm:$0xf]
      %v1493 = vld [vmem:[%s252 + $0x3c] sm:$0xf]
      %v1494 = vld [vmem:[%s252 + $0x40] sm:$0xf]
      %v1495 = vld [vmem:[%s252 + $0x44] sm:$0xf]
      %v1496 = vld [vmem:[%s252 + $0x48] sm:$0x1]
      %s1497 = scalar_lea.vmem %s1, 14
      %v1498 = vld [vmem:[%s1497] sm:$0x3]
      %v1514 = vunpack.c.l.b16 %v1482
      %v1515 = vunpack.c.l.b16 %v1483
      %v1516 = vunpack.c.l.b16 %v1484
      %v1517 = vunpack.c.l.b16 %v1485
      %v1518 = vunpack.c.l.b16 %v1486
      %v1519 = vunpack.c.l.b16 %v1487
      %v1520 = vunpack.c.l.b16 %v1488
      %v1521 = vunpack.c.l.b16 %v1489
      %v1522 = vunpack.c.l.b16 %v1490
      %v1523 = vunpack.c.l.b16 %v1491
      %v1524 = vunpack.c.l.b16 %v1492
      %v1525 = vunpack.c.l.b16 %v1493
      %v1526 = vunpack.c.l.b16 %v1494
      %v1527 = vunpack.c.l.b16 %v1495
      %v1528 = vunpack.c.l.b16 %v1496
      %v1529 = vpack.c.b16 %v1515, %v1514
      %v1530 = vpack.c.b16 %v1517, %v1516
      %v1531 = vpack.c.b16 %v1519, %v1518
      %v1532 = vpack.c.b16 %v1521, %v1520
      %v1533 = vpack.c.b16 %v1523, %v1522
      %v1534 = vpack.c.b16 %v1525, %v1524
      %v1535 = vpack.c.b16 %v1527, %v1526
      %v1536 = vpack.c.b16 %v1528, %v1528
      %vm1537 = vsmask.f32 5376
      %v1539 = vshrl.u32 %v1529, 16
      %v1541 = vrot.slane %v1539, 2
      %v1542 = vshll.u32 %v1529, 16
      %v1544 = vrot.slane %v1542, 3
      %v1545 = vor.u32 %v1541, %v1544
      %v1547 = vshrl.u32 %v1530, 16
      %v1549 = vrot.slane %v1547, 2
      %v1550 = vshll.u32 %v1530, 16
      %v1552 = vrot.slane %v1550, 3
      %v1553 = vor.u32 %v1549, %v1552
      %v1554 = vsel %vm1537, %v1545, %v1553
      %v1556 = vshrl.u32 %v1531, 16
      %v1558 = vrot.slane %v1556, 2
      %v1559 = vshll.u32 %v1531, 16
      %v1561 = vrot.slane %v1559, 3
      %v1562 = vor.u32 %v1558, %v1561
      %v1563 = vsel %vm1537, %v1553, %v1562
      %v1565 = vshrl.u32 %v1532, 16
      %v1567 = vrot.slane %v1565, 2
      %v1568 = vshll.u32 %v1532, 16
      %v1570 = vrot.slane %v1568, 3
      %v1571 = vor.u32 %v1567, %v1570
      %v1572 = vsel %vm1537, %v1562, %v1571
      %v1574 = vshrl.u32 %v1533, 16
      %v1576 = vrot.slane %v1574, 2
      %v1577 = vshll.u32 %v1533, 16
      %v1579 = vrot.slane %v1577, 3
      %v1580 = vor.u32 %v1576, %v1579
      %v1581 = vsel %vm1537, %v1571, %v1580
      %v1583 = vshrl.u32 %v1534, 16
      %v1585 = vrot.slane %v1583, 2
      %v1586 = vshll.u32 %v1534, 16
      %v1588 = vrot.slane %v1586, 3
      %v1589 = vor.u32 %v1585, %v1588
      %v1590 = vsel %vm1537, %v1580, %v1589
      %v1592 = vshrl.u32 %v1535, 16
      %v1594 = vrot.slane %v1592, 2
      %v1595 = vshll.u32 %v1535, 16
      %v1597 = vrot.slane %v1595, 3
      %v1598 = vor.u32 %v1594, %v1597
      %v1599 = vsel %vm1537, %v1589, %v1598
      %v1601 = vshll.u32 %v1536, 16
      %v1603 = vrot.slane %v1601, 3
      %v1604 = vsel %vm1537, %v1598, %v1603
      %v1606 = vsel %vm385, %v1554, 0
      %v1609 = vsel %vm385, %v1563, 0
      %v1612 = vsel %vm385, %v1572, 0
      %v1615 = vsel %vm385, %v1581, 0
      %v1618 = vsel %vm385, %v1590, 0
      %v1621 = vsel %vm385, %v1599, 0
      %v1624 = vsel %vm385, %v1604, 0
      %v1627 = vsel %vm407, %v1498, 0
      %1629 = vmatprep.subr.bf16.mxu0 0
      %1630 = vmatpush1.bf16.msra.mxu0 0
      %1631 = vmatprep.subr.bf16.mxu0 0
      %1632 = vmatpush1.bf16.msra.mxu0 0
      %1633 = vmatprep.subr.bf16.mxu0 0
      %1634 = vmatpush1.bf16.msra.mxu0 0
      %1635 = vmatprep.subr.bf16.mxu0 0
      %1636 = vmatpush1.bf16.msra.mxu0 0
      %1637 = vmatprep.subr.bf16.mxu0 0
      %1638 = vmatpush1.bf16.msra.mxu0 0
      %1639 = vmatprep.subr.bf16.mxu0 0
      %1640 = vmatpush1.bf16.msra.mxu0 0
      %1641 = vmatprep.subr.bf16.mxu0 0
      %1642 = vmatpush1.bf16.msra.mxu0 0
      %1643 = vmatprep.subr.bf16.mxu0 0
      %1644 = vmatpush1.bf16.msra.mxu0 %v1627
      %1645 = vmatprep.subr.bf16.mxu0 0
      %1646 = vmatpush2.bf16.msra.mxu0 0
      %1647 = vmatprep.subr.bf16.mxu0 0
      %1648 = vmatpush2.bf16.msra.mxu0 0
      %1649 = vmatprep.subr.bf16.mxu0 0
      %1650 = vmatpush2.bf16.msra.mxu0 0
      %1651 = vmatprep.subr.bf16.mxu0 0
      %1652 = vmatpush2.bf16.msra.mxu0 0
      %1653 = vmatprep.subr.bf16.mxu0 0
      %1654 = vmatpush2.bf16.msra.mxu0 0
      %1655 = vmatprep.subr.bf16.mxu0 0
      %1656 = vmatpush2.bf16.msra.mxu0 0
      %1657 = vmatprep.subr.bf16.mxu0 0
      %1658 = vmatpush2.bf16.msra.mxu0 0
      %1659 = vmatprep.subr.bf16.mxu0 0
      %1660 = vmatpush2.bf16.msra.mxu0 0
      %1661 = vmatprep.mubr.bf16.mxu0 0
      %1662 = vmatmul.mubr.bf16.gmra.mxu0 %v1606
      %v1663 = vpop.f32.mrf.mxu0
      %v1664 = vadd.f32 0.0, %v1663
      %v1665 = vpop.f32.mrf.mxu0
      %v1666 = vpop.f32.mrf.mxu0
      %v1667 = vadd.f32 0.0, %v1666
      %v1668 = vpop.f32.mrf.mxu0
      %1669 = vmatprep.mubr.bf16.mxu0 0
      %1670 = vmatmul.mubr.bf16.gmra.mxu0 %v1609
      %v1671 = vpop.f32.mrf.mxu0
      %v1672 = vadd.f32 0.0, %v1671
      %v1673 = vpop.f32.mrf.mxu0
      %v1674 = vpop.f32.mrf.mxu0
      %v1675 = vadd.f32 0.0, %v1674
      %v1676 = vpop.f32.mrf.mxu0
      %1677 = vmatprep.mubr.bf16.mxu0 0
      %1678 = vmatmul.mubr.bf16.gmra.mxu0 %v1612
      %v1679 = vpop.f32.mrf.mxu0
      %v1680 = vadd.f32 0.0, %v1679
      %v1681 = vpop.f32.mrf.mxu0
      %v1682 = vpop.f32.mrf.mxu0
      %v1683 = vadd.f32 0.0, %v1682
      %v1684 = vpop.f32.mrf.mxu0
      %1685 = vmatprep.mubr.bf16.mxu0 0
      %1686 = vmatmul.mubr.bf16.gmra.mxu0 %v1615
      %v1687 = vpop.f32.mrf.mxu0
      %v1688 = vadd.f32 0.0, %v1687
      %v1689 = vpop.f32.mrf.mxu0
      %v1690 = vpop.f32.mrf.mxu0
      %v1691 = vadd.f32 0.0, %v1690
      %v1692 = vpop.f32.mrf.mxu0
      %1693 = vmatprep.mubr.bf16.mxu0 0
      %1694 = vmatmul.mubr.bf16.gmra.mxu0 %v1618
      %v1695 = vpop.f32.mrf.mxu0
      %v1696 = vadd.f32 0.0, %v1695
      %v1697 = vpop.f32.mrf.mxu0
      %v1698 = vpop.f32.mrf.mxu0
      %v1699 = vadd.f32 0.0, %v1698
      %v1700 = vpop.f32.mrf.mxu0
      %1701 = vmatprep.mubr.bf16.mxu0 0
      %1702 = vmatmul.mubr.bf16.gmra.mxu0 %v1621
      %v1703 = vpop.f32.mrf.mxu0
      %v1704 = vadd.f32 0.0, %v1703
      %v1705 = vpop.f32.mrf.mxu0
      %v1706 = vpop.f32.mrf.mxu0
      %v1707 = vadd.f32 0.0, %v1706
      %v1708 = vpop.f32.mrf.mxu0
      %1709 = vmatprep.mubr.bf16.mxu0 0
      %1710 = vmatmul.mubr.bf16.gmra.mxu0 %v1624
      %v1711 = vpop.f32.mrf.mxu0
      %v1712 = vadd.f32 0.0, %v1711
      %v1713 = vpop.f32.mrf.mxu0
      %v1714 = vpop.f32.mrf.mxu0
      %v1715 = vadd.f32 0.0, %v1714
      %v1716 = vpop.f32.mrf.mxu0
      %1717 = vdwg.mxu0
      %v1718 = vadd.f32 %v1468, %v1664
      %v1719 = vadd.f32 %v1469, %v1667
      %v1720 = vadd.f32 %v1470, %v1672
      %v1721 = vadd.f32 %v1471, %v1675
      %v1722 = vadd.f32 %v1472, %v1680
      %v1723 = vadd.f32 %v1473, %v1683
      %v1724 = vadd.f32 %v1474, %v1688
      %v1725 = vadd.f32 %v1475, %v1691
      %v1726 = vadd.f32 %v1476, %v1696
      %v1727 = vadd.f32 %v1477, %v1699
      %v1728 = vadd.f32 %v1478, %v1704
      %v1729 = vadd.f32 %v1479, %v1707
      %v1730 = vadd.f32 %v1480, %v1712
      %v1731 = vadd.f32 %v1481, %v1715
      %v1732 = vld [vmem:[%s252 + $0x10] sm:$0x8]
      %s1733 = scalar_lea.vmem %s1, 16
      %v1734 = vld [vmem:[%s1733] sm:$0x3]
      %v1736 = vunpack.c.l.b16 %v1732
      %v1737 = vpack.c.b16 %v1515, %v1736
      %vm1738 = vcmask 1044480
      %v1739 = vrot.slane %v1737, 3
      %v1740 = vrot.slane %v1530, 3
      %v1741 = vsel %vm1738, %v1739, %v1740
      %v1742 = vrot.slane %v1531, 3
      %v1743 = vsel %vm1738, %v1740, %v1742
      %v1744 = vrot.slane %v1532, 3
      %v1745 = vsel %vm1738, %v1742, %v1744
      %v1746 = vrot.slane %v1533, 3
      %v1747 = vsel %vm1738, %v1744, %v1746
      %v1748 = vrot.slane %v1534, 3
      %v1749 = vsel %vm1738, %v1746, %v1748
      %v1750 = vrot.slane %v1535, 3
      %v1751 = vsel %vm1738, %v1748, %v1750
      %v1752 = vrot.slane %v1536, 3
      %v1753 = vsel %vm1738, %v1750, %v1752
      %v1755 = vsel %vm385, %v1741, 0
      %v1758 = vsel %vm385, %v1743, 0
      %v1761 = vsel %vm385, %v1745, 0
      %v1764 = vsel %vm385, %v1747, 0
      %v1767 = vsel %vm385, %v1749, 0
      %v1770 = vsel %vm385, %v1751, 0
      %v1773 = vsel %vm385, %v1753, 0
      %v1776 = vsel %vm407, %v1734, 0
      %1778 = vmatprep.subr.bf16.mxu0 0
      %1779 = vmatpush1.bf16.msra.mxu0 0
      %1780 = vmatprep.subr.bf16.mxu0 0
      %1781 = vmatpush1.bf16.msra.mxu0 0
      %1782 = vmatprep.subr.bf16.mxu0 0
      %1783 = vmatpush1.bf16.msra.mxu0 0
      %1784 = vmatprep.subr.bf16.mxu0 0
      %1785 = vmatpush1.bf16.msra.mxu0 0
      %1786 = vmatprep.subr.bf16.mxu0 0
      %1787 = vmatpush1.bf16.msra.mxu0 0
      %1788 = vmatprep.subr.bf16.mxu0 0
      %1789 = vmatpush1.bf16.msra.mxu0 0
      %1790 = vmatprep.subr.bf16.mxu0 0
      %1791 = vmatpush1.bf16.msra.mxu0 0
      %1792 = vmatprep.subr.bf16.mxu0 0
      %1793 = vmatpush1.bf16.msra.mxu0 %v1776
      %1794 = vmatprep.subr.bf16.mxu0 0
      %1795 = vmatpush2.bf16.msra.mxu0 0
      %1796 = vmatprep.subr.bf16.mxu0 0
      %1797 = vmatpush2.bf16.msra.mxu0 0
      %1798 = vmatprep.subr.bf16.mxu0 0
      %1799 = vmatpush2.bf16.msra.mxu0 0
      %1800 = vmatprep.subr.bf16.mxu0 0
      %1801 = vmatpush2.bf16.msra.mxu0 0
      %1802 = vmatprep.subr.bf16.mxu0 0
      %1803 = vmatpush2.bf16.msra.mxu0 0
      %1804 = vmatprep.subr.bf16.mxu0 0
      %1805 = vmatpush2.bf16.msra.mxu0 0
      %1806 = vmatprep.subr.bf16.mxu0 0
      %1807 = vmatpush2.bf16.msra.mxu0 0
      %1808 = vmatprep.subr.bf16.mxu0 0
      %1809 = vmatpush2.bf16.msra.mxu0 0
      %1810 = vmatprep.mubr.bf16.mxu0 0
      %1811 = vmatmul.mubr.bf16.gmra.mxu0 %v1755
      %v1812 = vpop.f32.mrf.mxu0
      %v1813 = vadd.f32 0.0, %v1812
      %v1814 = vpop.f32.mrf.mxu0
      %v1815 = vpop.f32.mrf.mxu0
      %v1816 = vadd.f32 0.0, %v1815
      %v1817 = vpop.f32.mrf.mxu0
      %1818 = vmatprep.mubr.bf16.mxu0 0
      %1819 = vmatmul.mubr.bf16.gmra.mxu0 %v1758
      %v1820 = vpop.f32.mrf.mxu0
      %v1821 = vadd.f32 0.0, %v1820
      %v1822 = vpop.f32.mrf.mxu0
      %v1823 = vpop.f32.mrf.mxu0
      %v1824 = vadd.f32 0.0, %v1823
      %v1825 = vpop.f32.mrf.mxu0
      %1826 = vmatprep.mubr.bf16.mxu0 0
      %1827 = vmatmul.mubr.bf16.gmra.mxu0 %v1761
      %v1828 = vpop.f32.mrf.mxu0
      %v1829 = vadd.f32 0.0, %v1828
      %v1830 = vpop.f32.mrf.mxu0
      %v1831 = vpop.f32.mrf.mxu0
      %v1832 = vadd.f32 0.0, %v1831
      %v1833 = vpop.f32.mrf.mxu0
      %1834 = vmatprep.mubr.bf16.mxu0 0
      %1835 = vmatmul.mubr.bf16.gmra.mxu0 %v1764
      %v1836 = vpop.f32.mrf.mxu0
      %v1837 = vadd.f32 0.0, %v1836
      %v1838 = vpop.f32.mrf.mxu0
      %v1839 = vpop.f32.mrf.mxu0
      %v1840 = vadd.f32 0.0, %v1839
      %v1841 = vpop.f32.mrf.mxu0
      %1842 = vmatprep.mubr.bf16.mxu0 0
      %1843 = vmatmul.mubr.bf16.gmra.mxu0 %v1767
      %v1844 = vpop.f32.mrf.mxu0
      %v1845 = vadd.f32 0.0, %v1844
      %v1846 = vpop.f32.mrf.mxu0
      %v1847 = vpop.f32.mrf.mxu0
      %v1848 = vadd.f32 0.0, %v1847
      %v1849 = vpop.f32.mrf.mxu0
      %1850 = vmatprep.mubr.bf16.mxu0 0
      %1851 = vmatmul.mubr.bf16.gmra.mxu0 %v1770
      %v1852 = vpop.f32.mrf.mxu0
      %v1853 = vadd.f32 0.0, %v1852
      %v1854 = vpop.f32.mrf.mxu0
      %v1855 = vpop.f32.mrf.mxu0
      %v1856 = vadd.f32 0.0, %v1855
      %v1857 = vpop.f32.mrf.mxu0
      %1858 = vmatprep.mubr.bf16.mxu0 0
      %1859 = vmatmul.mubr.bf16.gmra.mxu0 %v1773
      %v1860 = vpop.f32.mrf.mxu0
      %v1861 = vadd.f32 0.0, %v1860
      %v1862 = vpop.f32.mrf.mxu0
      %v1863 = vpop.f32.mrf.mxu0
      %v1864 = vadd.f32 0.0, %v1863
      %v1865 = vpop.f32.mrf.mxu0
      %1866 = vdwg.mxu0
      %v1867 = vadd.f32 %v1718, %v1813
      %v1868 = vadd.f32 %v1719, %v1816
      %v1869 = vadd.f32 %v1720, %v1821
      %v1870 = vadd.f32 %v1721, %v1824
      %v1871 = vadd.f32 %v1722, %v1829
      %v1872 = vadd.f32 %v1723, %v1832
      %v1873 = vadd.f32 %v1724, %v1837
      %v1874 = vadd.f32 %v1725, %v1840
      %v1875 = vadd.f32 %v1726, %v1845
      %v1876 = vadd.f32 %v1727, %v1848
      %v1877 = vadd.f32 %v1728, %v1853
      %v1878 = vadd.f32 %v1729, %v1856
      %v1879 = vadd.f32 %v1730, %v1861
      %v1880 = vadd.f32 %v1731, %v1864
      %1881 = vst [vmem:[%s266] sm:$0xff] %v1867
      %1882 = vst [vmem:[%s266 + $0x8] sm:$0xff] %v1868
      %1883 = vst [vmem:[%s266 + $0x10] sm:$0xff] %v1869
      %1884 = vst [vmem:[%s266 + $0x18] sm:$0xff] %v1870
      %1885 = vst [vmem:[%s266 + $0x20] sm:$0xff] %v1871
      %1886 = vst [vmem:[%s266 + $0x28] sm:$0xff] %v1872
      %1887 = vst [vmem:[%s266 + $0x30] sm:$0xff] %v1873
      %1888 = vst [vmem:[%s266 + $0x38] sm:$0xff] %v1874
      %1889 = vst [vmem:[%s266 + $0x40] sm:$0xff] %v1875
      %1890 = vst [vmem:[%s266 + $0x48] sm:$0xff] %v1876
      %1891 = vst [vmem:[%s266 + $0x50] sm:$0xff] %v1877
      %1892 = vst [vmem:[%s266 + $0x58] sm:$0xff] %v1878
      %1893 = vst [vmem:[%s266 + $0x60] sm:$0xff] %v1879
      %1894 = vst [vmem:[%s266 + $0x68] sm:$0xf] %v1880
      %v1895 = vld [vmem:[%s257] sm:$0xff]
      %v1896 = vld [vmem:[%s257 + $0x8] sm:$0xff]
      %v1897 = vld [vmem:[%s257 + $0x10] sm:$0xff]
      %v1898 = vld [vmem:[%s257 + $0x18] sm:$0xff]
      %v1899 = vld [vmem:[%s257 + $0x20] sm:$0xff]
      %v1900 = vld [vmem:[%s257 + $0x28] sm:$0xff]
      %v1901 = vld [vmem:[%s257 + $0x30] sm:$0xff]
      %v1902 = vld [vmem:[%s257 + $0x38] sm:$0xff]
      %v1903 = vld [vmem:[%s257 + $0x40] sm:$0xff]
      %v1904 = vld [vmem:[%s257 + $0x48] sm:$0xff]
      %v1905 = vld [vmem:[%s257 + $0x50] sm:$0xff]
      %v1906 = vld [vmem:[%s257 + $0x58] sm:$0xff]
      %v1907 = vld [vmem:[%s257 + $0x60] sm:$0xff]
      %v1908 = vld [vmem:[%s257 + $0x68] sm:$0xf]
      %1910 = vset.pattern.permute.xlu0 0
      %1911 = vperm.xlu0 %1910, %v1895
      %v1912 = vpop.permute.xlu0 %1911
      %1915 = vset.pattern.permute.xlu0 0
      %1916 = vperm.xlu0 %1915, %v1896
      %v1917 = vpop.permute.xlu0 %1916
      %1920 = vset.pattern.permute.xlu0 0
      %1921 = vperm.xlu0 %1920, %v1897
      %v1922 = vpop.permute.xlu0 %1921
      %1925 = vset.pattern.permute.xlu0 0
      %1926 = vperm.xlu0 %1925, %v1898
      %v1927 = vpop.permute.xlu0 %1926
      %1930 = vset.pattern.permute.xlu0 0
      %1931 = vperm.xlu0 %1930, %v1899
      %v1932 = vpop.permute.xlu0 %1931
      %1935 = vset.pattern.permute.xlu0 0
      %1936 = vperm.xlu0 %1935, %v1900
      %v1937 = vpop.permute.xlu0 %1936
      %1940 = vset.pattern.permute.xlu0 0
      %1941 = vperm.xlu0 %1940, %v1901
      %v1942 = vpop.permute.xlu0 %1941
      %1945 = vset.pattern.permute.xlu0 0
      %1946 = vperm.xlu0 %1945, %v1902
      %v1947 = vpop.permute.xlu0 %1946
      %1950 = vset.pattern.permute.xlu0 0
      %1951 = vperm.xlu0 %1950, %v1903
      %v1952 = vpop.permute.xlu0 %1951
      %1955 = vset.pattern.permute.xlu0 0
      %1956 = vperm.xlu0 %1955, %v1904
      %v1957 = vpop.permute.xlu0 %1956
      %1960 = vset.pattern.permute.xlu0 0
      %1961 = vperm.xlu0 %1960, %v1905
      %v1962 = vpop.permute.xlu0 %1961
      %1965 = vset.pattern.permute.xlu0 0
      %1966 = vperm.xlu0 %1965, %v1906
      %v1967 = vpop.permute.xlu0 %1966
      %1970 = vset.pattern.permute.xlu0 0
      %1971 = vperm.xlu0 %1970, %v1907
      %v1972 = vpop.permute.xlu0 %1971
      %1975 = vset.pattern.permute.xlu0 0
      %1976 = vperm.xlu0 %1975, %v1908
      %v1977 = vpop.permute.xlu0 %1976
      %v1979 = vmul.f32 %v1867, %v1912
      %v1980 = vmul.f32 %v1868, %v1917
      %v1981 = vmul.f32 %v1869, %v1922
      %v1982 = vmul.f32 %v1870, %v1927
      %v1983 = vmul.f32 %v1871, %v1932
      %v1984 = vmul.f32 %v1872, %v1937
      %v1985 = vmul.f32 %v1873, %v1942
      %v1986 = vmul.f32 %v1874, %v1947
      %v1987 = vmul.f32 %v1875, %v1952
      %v1988 = vmul.f32 %v1876, %v1957
      %v1989 = vmul.f32 %v1877, %v1962
      %v1990 = vmul.f32 %v1878, %v1967
      %v1991 = vmul.f32 %v1879, %v1972
      %v1992 = vmul.f32 %v1880, %v1977
      %v1993 = vadd.f32 %v1979, %v1980
      %v1994 = vadd.f32 %v1993, %v1981
      %v1995 = vadd.f32 %v1994, %v1982
      %v1996 = vadd.f32 %v1995, %v1983
      %v1997 = vadd.f32 %v1996, %v1984
      %v1998 = vadd.f32 %v1997, %v1985
      %v1999 = vadd.f32 %v1998, %v1986
      %v2000 = vadd.f32 %v1999, %v1987
      %v2001 = vadd.f32 %v2000, %v1988
      %v2002 = vadd.f32 %v2001, %v1989
      %v2003 = vadd.f32 %v2002, %v1990
      %v2004 = vadd.f32 %v2003, %v1991
      %vm2005 = vcmask 1043456
      %v2006 = vsel %vm2005, %v1992, 0.0
      %v2007 = vadd.f32 %v2004, %v2006
      %v2008 = vrot.slane %v2007, 4
      %v2009 = vadd.f32 %v2007, %v2008
      %v2010 = vrot.slane %v2009, 2
      %v2011 = vadd.f32 %v2009, %v2010
      %v2012 = vrot.slane %v2011, 1
      %v2013 = vadd.f32 %v2011, %v2012
      %2014 = vst [vmem:[%s274] sm:$0x1] %v2013
      %v2015 = vmul.f32 %v1979, %v1867
      %v2016 = vmul.f32 %v1980, %v1868
      %v2017 = vmul.f32 %v1981, %v1869
      %v2018 = vmul.f32 %v1982, %v1870
      %v2019 = vmul.f32 %v1983, %v1871
      %v2020 = vmul.f32 %v1984, %v1872
      %v2021 = vmul.f32 %v1985, %v1873
      %v2022 = vmul.f32 %v1986, %v1874
      %v2023 = vmul.f32 %v1987, %v1875
      %v2024 = vmul.f32 %v1988, %v1876
      %v2025 = vmul.f32 %v1989, %v1877
      %v2026 = vmul.f32 %v1990, %v1878
      %v2027 = vmul.f32 %v1991, %v1879
      %v2028 = vmul.f32 %v1992, %v1880
      %v2029 = vadd.f32 %v2015, %v2016
      %v2030 = vadd.f32 %v2029, %v2017
      %v2031 = vadd.f32 %v2030, %v2018
      %v2032 = vadd.f32 %v2031, %v2019
      %v2033 = vadd.f32 %v2032, %v2020
      %v2034 = vadd.f32 %v2033, %v2021
      %v2035 = vadd.f32 %v2034, %v2022
      %v2036 = vadd.f32 %v2035, %v2023
      %v2037 = vadd.f32 %v2036, %v2024
      %v2038 = vadd.f32 %v2037, %v2025
      %v2039 = vadd.f32 %v2038, %v2026
      %v2040 = vadd.f32 %v2039, %v2027
      %v2041 = vsel %vm2005, %v2028, 0.0
      %v2042 = vadd.f32 %v2040, %v2041
      %v2043 = vrot.slane %v2042, 4
      %v2044 = vadd.f32 %v2042, %v2043
      %v2045 = vrot.slane %v2044, 2
      %v2046 = vadd.f32 %v2044, %v2045
      %v2047 = vrot.slane %v2046, 1
      %v2048 = vadd.f32 %v2046, %v2047
      %2049 = vst [vmem:[%s274 + $0x1] sm:$0x1] %v2048
      %p2050 = scmp.lt.s32.totalorder %s20, 1
      %s2051 = scalar_select %p2050, %s20, 1
      %p2052 = scmp.lt.s32.totalorder %s21, 2
      %s2053 = scalar_select %p2052, %s21, 2
      %s2054 = smul.addr %s2053, 14
      %s2055 = smul.addr %s2051, 42
      %s2056 = sadd.s32 %s2054, %s2055
      %s2057 = smul.addr %s2056, 8
      %s2058 = scalar_lea.vmem %s3, %s2057
      %p2059 = scmp.lt.s32.totalorder %s20, 1
      %s2060 = scalar_select %p2059, %s20, 1
      %p2061 = scmp.lt.s32.totalorder %s21, 2
      %s2062 = scalar_select %p2061, %s21, 2
      %s2063 = smul.addr %s2060, 3
      %s2064 = sadd.s32 %s2062, %s2063
      %s2065 = smul.addr %s2064, 2
      %s2066 = scalar_lea.vmem %s4, %s2065
      // Predicated region
      $region33: #{conv_block_forward.2} parent=31 // pred_check
        %p2067 = pneg %p123
      $region34: #{conv_block_forward.2} parent=31 // pred_check_branch
        %2069 = sbr.rel (%p2067) target = $region36
      $region35: #{conv_block_forward.2} parent=31 // pred_region
        _
      $region36: #{conv_block_forward.2} parent=31 // pred_fallthru
        _
      // Predicated region
      $region37: #{conv_block_forward.2} parent=31 // pred_check
        %p2070 = pneg %p151
      $region38: #{conv_block_forward.2} parent=31 // pred_check_branch
        %2072 = sbr.rel (%p2070) target = $region40
      $region39: #{conv_block_forward.2} parent=31 // pred_region
        _
      $region40: #{conv_block_forward.2} parent=31 // pred_fallthru
        _
    $region32: #{conv_block_forward.2} parent=5 // pred_fallthru
      _
    %p2073 = scmp.le.s32.totalorder 2, %s11
    // Predicated region
    $region41: #{conv_block_forward.2} parent=5 // pred_check
      %p2074 = pneg %p2073
    $region42: #{conv_block_forward.2} parent=5 // pred_check_branch
      %2076 = sbr.rel (%p2074) target = $region44
    $region43: #{conv_block_forward.2} parent=5 // pred_region
      %s2077 = ssub.s32 %s11, 2
      // Predicated region
      $region45: #{conv_block_forward.2} parent=43 // pred_check
        %p2078 = pneg %p129
      $region46: #{conv_block_forward.2} parent=43 // pred_check_branch
        %2080 = sbr.rel (%p2078) target = $region48
      $region47: #{conv_block_forward.2} parent=43 // pred_region
        %p2081 = scmp.lt.s32.totalorder %s22, 1
        %s2082 = scalar_select %p2081, %s22, 1
        %p2083 = scmp.lt.s32.totalorder %s23, 2
        %s2084 = scalar_select %p2083, %s23, 2
        %s2085 = smul.addr %s2084, 14
        %s2086 = smul.addr %s2082, 42
        %s2087 = sadd.s32 %s2085, %s2086
        %s2088 = smul.addr %s2087, 8
        %s2089 = scalar_lea.vmem %s3, %s2088
      $region48: #{conv_block_forward.2} parent=43 // pred_fallthru
        _
      // Predicated region
      $region49: #{conv_block_forward.2} parent=43 // pred_check
        %p2090 = pneg %p157
      $region50: #{conv_block_forward.2} parent=43 // pred_check_branch
        %2092 = sbr.rel (%p2090) target = $region52
      $region51: #{conv_block_forward.2} parent=43 // pred_region
        %p2093 = scmp.lt.s32.totalorder %s22, 1
        %s2094 = scalar_select %p2093, %s22, 1
        %p2095 = scmp.lt.s32.totalorder %s23, 2
        %s2096 = scalar_select %p2095, %s23, 2
        %s2097 = smul.addr %s2094, 3
        %s2098 = sadd.s32 %s2096, %s2097
        %s2099 = smul.addr %s2098, 2
        %s2100 = scalar_lea.vmem %s4, %s2099
      $region52: #{conv_block_forward.2} parent=43 // pred_fallthru
        _
    $region44: #{conv_block_forward.2} parent=5 // pred_fallthru
      _
  $region6: #{conv_block_forward.2} parent=0 // loop_footer
    %s15 = sadd.s32 1, %s11
  $region7: #{conv_block_forward.2} parent=0 // loop_footer_branch
    %10 = sbr.rel target = $region3
  $region8: #{conv_block_forward.2} parent=0 // loop_exit
    _

</llo_original>
